<compile_context>
chip_gen: v7x
topology: tpu7x:2x2x1
jax: 0.10.0
libtpu: 0.0.40
codegen_flags: <defaults>
</compile_context>

<pallas_src>
import functools

import jax
import jax.numpy as jnp
from jax import lax
from jax.experimental import pallas as pl
from jax.experimental.pallas import tpu as pltpu


def _convbr_kernel(x_ref, w_ref, bias_ref, o_ref, xp_ref, patches_ref, *,
                   h, w, ho, wo, kh, kw, stride, dilation, padding,
                   cin, cpad, bb):
    """bb batch elements: staged im2col + one MXU matmul + fused bias/ReLU.

    x_ref:       (bb, Cin, H, W)          bf16 input block (NCHW)
    w_ref:       (Cout, KH*KW*Cpad)       bf16 BN-scale-folded weights
                                          (zero columns for padded channels)
    bias_ref:    (Cout, 1)                f32 folded BN bias
    o_ref:       (bb, Cout, Ho*Wo)        f32 output block (spatial on lanes)
    xp_ref:      (Cin, H+2p, W+2p)        bf16 scratch: zero-padded input
    patches_ref: (KH*KW*Cpad, bb*Ho*Wo)   bf16 scratch: staged im2col matrix
    """
    how = ho * wo

    # Zero the staging buffer every step: the (cpad - cin) pad rows per tap
    # must be finite (their weight columns are zero, but uninitialised VMEM
    # can hold NaNs and 0 * NaN = NaN).
    patches_ref[...] = jnp.zeros(patches_ref.shape, patches_ref.dtype)

    # Zero only the halo of the padded-input scratch; the interior is fully
    # overwritten below.  Not gated on program_id==0: under "parallel"
    # megacore sharding core 1 never executes step 0.
    if padding > 0:
        hp, wp = h + 2 * padding, w + 2 * padding
        zrow = jnp.zeros((cin, padding, wp), xp_ref.dtype)
        zcol = jnp.zeros((cin, hp, padding), xp_ref.dtype)
        xp_ref[:, :padding, :] = zrow
        xp_ref[:, padding + h:, :] = zrow
        xp_ref[:, :, :padding] = zcol
        xp_ref[:, :, padding + w:] = zcol

    for b in range(bb):
        # Interior copy (overwrites last batch element's interior).
        xp_ref[:, padding:padding + h, padding:padding + w] = x_ref[b]
        lane0 = b * how                       # per-batch lane offset (128-aligned)
        for i in range(kh):
            for j in range(kw):
                t = i * kw + j
                h0 = i * dilation
                w0 = j * dilation
                if stride == 1:
                    patch = xp_ref[:, h0:h0 + ho, w0:w0 + wo]
                else:
                    # TODO(synk): lane-axis strided reads lower to XLU gathers;
                    # for stride>1 decimate W at copy time instead.
                    patch = xp_ref[:,
                                   pl.ds(h0, ho, stride=stride),
                                   pl.ds(w0, wo, stride=stride)]
                # Aligned cin-row store at sublane-aligned row offset t*cpad.
                patches_ref[pl.ds(t * cpad, cin), pl.ds(lane0, how)] = (
                    patch.reshape(cin, how))

    # One MXU matmul (bf16 x bf16 -> f32 accumulate), fused bias + ReLU.
    y = jnp.dot(w_ref[...], patches_ref[...],
                preferred_element_type=jnp.float32)    # (Cout, bb*Ho*Wo)
    y = jnp.maximum(y + bias_ref[...], 0.0)
    for b in range(bb):
        o_ref[b] = y[:, b * how:(b + 1) * how].astype(o_ref.dtype)


def convbr_forward(x_nchw, weight, gamma, beta, running_mean, running_var,
                   *, stride=1, padding=0, dilation=1, eps=1e-5,
                   batch_block=None):
    """Matches torch ConvBR.forward (BN in eval mode).

    x_nchw:  (N, Cin, H, W)      float32
    weight:  (Cout, Cin, KH, KW) float32  (PyTorch OIHW conv weight layout)
    returns: (N, Cout, Ho, Wo)   float32
    """
    n, cin, h, w = x_nchw.shape
    cout, cin_w, kh, kw = weight.shape
    assert cin == cin_w

    ho = (h + 2 * padding - dilation * (kh - 1) - 1) // stride + 1
    wo = (w + 2 * padding - dilation * (kw - 1) - 1) // stride + 1
    hp, wp = h + 2 * padding, w + 2 * padding
    how = ho * wo

    # Pad each tap's channel block to a sublane multiple so in-kernel stores
    # land on aligned 8-row boundaries; weights get matching zero columns.
    cpad = -(-cin // 8) * 8

    # Batch elements per grid step.  Default: two "parallel" steps so v7x's two
    # TensorCores each take half the batch; on single-TC v5e/v6e the second
    # step only adds ~0.35 us (pass batch_block=n for a single wider step).
    if batch_block is None:
        batch_block = n // 2 if (n >= 2 and n % 2 == 0) else n
    assert n % batch_block == 0
    num_steps = n // batch_block

    # BN folding (in f32): scale into conv weights, bias stays in the epilogue.
    inv_std = lax.rsqrt(running_var.astype(jnp.float32) + eps)
    scale = gamma.astype(jnp.float32) * inv_std                       # (Cout,)
    bias = (beta.astype(jnp.float32)
            - running_mean.astype(jnp.float32) * scale).reshape(cout, 1)

    # Weight layout (Cout, KH*KW*Cpad): tap-major (i*kw+j), channel-minor,
    # channels padded with zero columns to Cpad; cast to bf16 for the MXU.
    wt = jnp.transpose(weight, (0, 2, 3, 1)).astype(jnp.float32)      # (Cout,KH,KW,Cin)
    wt = wt * scale[:, None, None, None]
    wt = jnp.pad(wt, ((0, 0), (0, 0), (0, 0), (0, cpad - cin)))
    w2 = wt.reshape(cout, kh * kw * cpad).astype(jnp.bfloat16)

    x_bf = x_nchw.astype(jnp.bfloat16)

    kernel = functools.partial(
        _convbr_kernel, h=h, w=w, ho=ho, wo=wo, kh=kh, kw=kw, stride=stride,
        dilation=dilation, padding=padding, cin=cin, cpad=cpad, bb=batch_block)

    out_flat = pl.pallas_call(
        kernel,
        out_shape=jax.ShapeDtypeStruct((n, cout, how), jnp.float32),
        grid_spec=pltpu.PrefetchScalarGridSpec(
            num_scalar_prefetch=0,
            grid=(num_steps,),
            in_specs=[
                pl.BlockSpec((batch_block, cin, h, w), lambda s: (s, 0, 0, 0)),
                pl.BlockSpec((cout, kh * kw * cpad), lambda s: (0, 0)),
                pl.BlockSpec((cout, 1), lambda s: (0, 0)),
            ],
            out_specs=pl.BlockSpec((batch_block, cout, how),
                                   lambda s: (s, 0, 0)),
            scratch_shapes=[
                pltpu.VMEM((cin, hp, wp), jnp.bfloat16),
                pltpu.VMEM((kh * kw * cpad, batch_block * how), jnp.bfloat16),
            ],
        ),
        compiler_params=pltpu.CompilerParams(
            dimension_semantics=("parallel",),
            vmem_limit_bytes=32 * 1024 * 1024),
    )(x_bf, w2, bias)

    # Free (contiguous) reshape back to NCHW spatial dims.
    return out_flat.reshape(n, cout, ho, wo)


def _reference(x_nchw, weight, gamma, beta, running_mean, running_var,
               *, stride, padding, dilation, eps=1e-5):
    """Plain-JAX f32 reference (lax conv) for correctness check."""
    y = lax.conv_general_dilated(
        x_nchw, weight,
        window_strides=(stride, stride),
        padding=((padding, padding), (padding, padding)),
        rhs_dilation=(dilation, dilation),
        dimension_numbers=("NCHW", "OIHW", "NCHW"),
    )
    inv_std = 1.0 / jnp.sqrt(running_var + eps)
    scale = (gamma * inv_std).reshape(1, -1, 1, 1)
    bias = (beta - running_mean * gamma * inv_std).reshape(1, -1, 1, 1)
    return jnp.maximum(y * scale + bias, 0.0)


if __name__ == "__main__":
    # Module config: ConvBR(in_channel=4, out_channel=8, kernel_size=3,
    #                       stride=1, padding=1, dilation=1)
    N, CIN, H, W = 2, 4, 16, 16
    COUT, K = 8, 3
    STRIDE, PAD, DIL = 1, 1, 1

    key = jax.random.PRNGKey(0)
    kx, kw_, kg, kb, km, kv = jax.random.split(key, 6)

    x = jax.random.normal(kx, (N, CIN, H, W), dtype=jnp.float32)
    weight = jax.random.normal(kw_, (COUT, CIN, K, K), dtype=jnp.float32) * 0.1
    gamma = 1.0 + 0.1 * jax.random.normal(kg, (COUT,), dtype=jnp.float32)
    beta = 0.1 * jax.random.normal(kb, (COUT,), dtype=jnp.float32)
    running_mean = 0.1 * jax.random.normal(km, (COUT,), dtype=jnp.float32)
    running_var = jnp.abs(1.0 + 0.1 * jax.random.normal(
        kv, (COUT,), dtype=jnp.float32))

    out = convbr_forward(x, weight, gamma, beta, running_mean, running_var,
                         stride=STRIDE, padding=PAD, dilation=DIL)
    out = jax.block_until_ready(out)

    ref = _reference(x, weight, gamma, beta, running_mean, running_var,
                     stride=STRIDE, padding=PAD, dilation=DIL)
    assert out.shape == ref.shape == (N, COUT, H, W)
    # bf16 MXU operands (f32 accumulate) -> loosened tolerance vs. f32 reference.
    assert jnp.allclose(out, ref, atol=2e-2, rtol=2e-2), "mismatch vs reference"

    print("KERNEL_OK")
</pallas_src>

<mosaic_0001>
module attributes {stable_mosaic.version = 11 : i64} {
  func.func @_convbr_kernel(%arg0: i32, %arg1: memref<1x4x16x16xbf16, #tpu.memory_space<vmem>>, %arg2: memref<8x72xbf16, #tpu.memory_space<vmem>>, %arg3: memref<8x1xf32, #tpu.memory_space<vmem>>, %arg4: memref<1x8x256xf32, #tpu.memory_space<vmem>>, %arg5: memref<4x18x18xbf16, #tpu.memory_space<vmem>>, %arg6: memref<72x256xbf16, #tpu.memory_space<vmem>>) attributes {dimension_semantics = [#tpu.dimension_semantics<parallel>], iteration_bounds = array<i64: 2>, scalar_prefetch = 0 : i64, scratch_operands = 2 : i64, tpu.core_type = #tpu.core_type<tc>, window_params = [{transform_indices = @transform_0, window_bounds = array<i64: 1, 4, 16, 16>}, {pipeline_mode = #tpu.pipeline_mode<synchronous>, transform_indices = @transform_1, window_bounds = array<i64: 8, 72>}, {pipeline_mode = #tpu.pipeline_mode<synchronous>, transform_indices = @transform_2, window_bounds = array<i64: 8, 1>}, {transform_indices = @transform_3, window_bounds = array<i64: 1, 8, 256>}]} {
    %cst = arith.constant 0.000000e+00 : bf16
    %0 = vector.broadcast %cst : bf16 to vector<72x256xbf16>
    %c0 = arith.constant 0 : index
    %c0_0 = arith.constant 0 : index
    %1 = vector.load %arg6[%c0, %c0_0] : memref<72x256xbf16, #tpu.memory_space<vmem>>, vector<72x256xbf16>
    tpu.vector_store %arg6[%c0, %c0_0], %0 {strides = array<i32>} : memref<72x256xbf16, #tpu.memory_space<vmem>>, vector<72x256xbf16>,
    %cst_1 = arith.constant 0.000000e+00 : bf16
    %2 = vector.broadcast %cst_1 : bf16 to vector<4x1x18xbf16>
    %cst_2 = arith.constant 0.000000e+00 : bf16
    %3 = vector.broadcast %cst_2 : bf16 to vector<4x18x1xbf16>
    %c0_3 = arith.constant 0 : index
    %c0_4 = arith.constant 0 : index
    %c0_5 = arith.constant 0 : index
    %4 = vector.load %arg5[%c0_3, %c0_4, %c0_5] : memref<4x18x18xbf16, #tpu.memory_space<vmem>>, vector<4x1x18xbf16>
    tpu.vector_store %arg5[%c0_3, %c0_4, %c0_5], %2 {strides = array<i32>} : memref<4x18x18xbf16, #tpu.memory_space<vmem>>, vector<4x1x18xbf16>,
    %c0_6 = arith.constant 0 : index
    %c17 = arith.constant 17 : index
    %c0_7 = arith.constant 0 : index
    %5 = vector.load %arg5[%c0_6, %c17, %c0_7] : memref<4x18x18xbf16, #tpu.memory_space<vmem>>, vector<4x1x18xbf16>
    tpu.vector_store %arg5[%c0_6, %c17, %c0_7], %2 {strides = array<i32>} : memref<4x18x18xbf16, #tpu.memory_space<vmem>>, vector<4x1x18xbf16>,
    %c0_8 = arith.constant 0 : index
    %c0_9 = arith.constant 0 : index
    %c0_10 = arith.constant 0 : index
    %6 = vector.load %arg5[%c0_8, %c0_9, %c0_10] : memref<4x18x18xbf16, #tpu.memory_space<vmem>>, vector<4x18x1xbf16>
    tpu.vector_store %arg5[%c0_8, %c0_9, %c0_10], %3 {strides = array<i32>} : memref<4x18x18xbf16, #tpu.memory_space<vmem>>, vector<4x18x1xbf16>,
    %c0_11 = arith.constant 0 : index
    %c0_12 = arith.constant 0 : index
    %c17_13 = arith.constant 17 : index
    %7 = vector.load %arg5[%c0_11, %c0_12, %c17_13] : memref<4x18x18xbf16, #tpu.memory_space<vmem>>, vector<4x18x1xbf16>
    tpu.vector_store %arg5[%c0_11, %c0_12, %c17_13], %3 {strides = array<i32>} : memref<4x18x18xbf16, #tpu.memory_space<vmem>>, vector<4x18x1xbf16>,
    %c0_14 = arith.constant 0 : index
    %c0_15 = arith.constant 0 : index
    %c0_16 = arith.constant 0 : index
    %c0_17 = arith.constant 0 : index
    %8 = vector.load %arg1[%c0_14, %c0_15, %c0_16, %c0_17] : memref<1x4x16x16xbf16, #tpu.memory_space<vmem>>, vector<1x4x16x16xbf16>
    %9 = vector.shape_cast %8 : vector<1x4x16x16xbf16> to vector<4x16x16xbf16>
    %c0_18 = arith.constant 0 : index
    %c1 = arith.constant 1 : index
    %c1_19 = arith.constant 1 : index
    %10 = vector.load %arg5[%c0_18, %c1, %c1_19] : memref<4x18x18xbf16, #tpu.memory_space<vmem>>, vector<4x16x16xbf16>
    tpu.vector_store %arg5[%c0_18, %c1, %c1_19], %9 {strides = array<i32>} : memref<4x18x18xbf16, #tpu.memory_space<vmem>>, vector<4x16x16xbf16>,
    %c0_20 = arith.constant 0 : index
    %c0_21 = arith.constant 0 : index
    %c0_22 = arith.constant 0 : index
    %11 = vector.load %arg5[%c0_20, %c0_21, %c0_22] : memref<4x18x18xbf16, #tpu.memory_space<vmem>>, vector<4x16x16xbf16>
    %12 = vector.shape_cast %11 : vector<4x16x16xbf16> to vector<4x256xbf16>
    %c0_23 = arith.constant 0 : index
    %c0_24 = arith.constant 0 : index
    %13 = vector.load %arg6[%c0_23, %c0_24] : memref<72x256xbf16, #tpu.memory_space<vmem>>, vector<4x256xbf16>
    tpu.vector_store %arg6[%c0_23, %c0_24], %12 {strides = array<i32>} : memref<72x256xbf16, #tpu.memory_space<vmem>>, vector<4x256xbf16>,
    %c0_25 = arith.constant 0 : index
    %c0_26 = arith.constant 0 : index
    %c1_27 = arith.constant 1 : index
    %14 = vector.load %arg5[%c0_25, %c0_26, %c1_27] : memref<4x18x18xbf16, #tpu.memory_space<vmem>>, vector<4x16x16xbf16>
    %15 = vector.shape_cast %14 : vector<4x16x16xbf16> to vector<4x256xbf16>
    %c8 = arith.constant 8 : index
    %c0_28 = arith.constant 0 : index
    %16 = vector.load %arg6[%c8, %c0_28] : memref<72x256xbf16, #tpu.memory_space<vmem>>, vector<4x256xbf16>
    tpu.vector_store %arg6[%c8, %c0_28], %15 {strides = array<i32>} : memref<72x256xbf16, #tpu.memory_space<vmem>>, vector<4x256xbf16>,
    %c0_29 = arith.constant 0 : index
    %c0_30 = arith.constant 0 : index
    %c2 = arith.constant 2 : index
    %17 = vector.load %arg5[%c0_29, %c0_30, %c2] : memref<4x18x18xbf16, #tpu.memory_space<vmem>>, vector<4x16x16xbf16>
    %18 = vector.shape_cast %17 : vector<4x16x16xbf16> to vector<4x256xbf16>
    %c16 = arith.constant 16 : index
    %c0_31 = arith.constant 0 : index
    %19 = vector.load %arg6[%c16, %c0_31] : memref<72x256xbf16, #tpu.memory_space<vmem>>, vector<4x256xbf16>
    tpu.vector_store %arg6[%c16, %c0_31], %18 {strides = array<i32>} : memref<72x256xbf16, #tpu.memory_space<vmem>>, vector<4x256xbf16>,
    %c0_32 = arith.constant 0 : index
    %c1_33 = arith.constant 1 : index
    %c0_34 = arith.constant 0 : index
    %20 = vector.load %arg5[%c0_32, %c1_33, %c0_34] : memref<4x18x18xbf16, #tpu.memory_space<vmem>>, vector<4x16x16xbf16>
    %21 = vector.shape_cast %20 : vector<4x16x16xbf16> to vector<4x256xbf16>
    %c24 = arith.constant 24 : index
    %c0_35 = arith.constant 0 : index
    %22 = vector.load %arg6[%c24, %c0_35] : memref<72x256xbf16, #tpu.memory_space<vmem>>, vector<4x256xbf16>
    tpu.vector_store %arg6[%c24, %c0_35], %21 {strides = array<i32>} : memref<72x256xbf16, #tpu.memory_space<vmem>>, vector<4x256xbf16>,
    %c0_36 = arith.constant 0 : index
    %c1_37 = arith.constant 1 : index
    %c1_38 = arith.constant 1 : index
    %23 = vector.load %arg5[%c0_36, %c1_37, %c1_38] : memref<4x18x18xbf16, #tpu.memory_space<vmem>>, vector<4x16x16xbf16>
    %24 = vector.shape_cast %23 : vector<4x16x16xbf16> to vector<4x256xbf16>
    %c32 = arith.constant 32 : index
    %c0_39 = arith.constant 0 : index
    %25 = vector.load %arg6[%c32, %c0_39] : memref<72x256xbf16, #tpu.memory_space<vmem>>, vector<4x256xbf16>
    tpu.vector_store %arg6[%c32, %c0_39], %24 {strides = array<i32>} : memref<72x256xbf16, #tpu.memory_space<vmem>>, vector<4x256xbf16>,
    %c0_40 = arith.constant 0 : index
    %c1_41 = arith.constant 1 : index
    %c2_42 = arith.constant 2 : index
    %26 = vector.load %arg5[%c0_40, %c1_41, %c2_42] : memref<4x18x18xbf16, #tpu.memory_space<vmem>>, vector<4x16x16xbf16>
    %27 = vector.shape_cast %26 : vector<4x16x16xbf16> to vector<4x256xbf16>
    %c40 = arith.constant 40 : index
    %c0_43 = arith.constant 0 : index
    %28 = vector.load %arg6[%c40, %c0_43] : memref<72x256xbf16, #tpu.memory_space<vmem>>, vector<4x256xbf16>
    tpu.vector_store %arg6[%c40, %c0_43], %27 {strides = array<i32>} : memref<72x256xbf16, #tpu.memory_space<vmem>>, vector<4x256xbf16>,
    %c0_44 = arith.constant 0 : index
    %c2_45 = arith.constant 2 : index
    %c0_46 = arith.constant 0 : index
    %29 = vector.load %arg5[%c0_44, %c2_45, %c0_46] : memref<4x18x18xbf16, #tpu.memory_space<vmem>>, vector<4x16x16xbf16>
    %30 = vector.shape_cast %29 : vector<4x16x16xbf16> to vector<4x256xbf16>
    %c48 = arith.constant 48 : index
    %c0_47 = arith.constant 0 : index
    %31 = vector.load %arg6[%c48, %c0_47] : memref<72x256xbf16, #tpu.memory_space<vmem>>, vector<4x256xbf16>
    tpu.vector_store %arg6[%c48, %c0_47], %30 {strides = array<i32>} : memref<72x256xbf16, #tpu.memory_space<vmem>>, vector<4x256xbf16>,
    %c0_48 = arith.constant 0 : index
    %c2_49 = arith.constant 2 : index
    %c1_50 = arith.constant 1 : index
    %32 = vector.load %arg5[%c0_48, %c2_49, %c1_50] : memref<4x18x18xbf16, #tpu.memory_space<vmem>>, vector<4x16x16xbf16>
    %33 = vector.shape_cast %32 : vector<4x16x16xbf16> to vector<4x256xbf16>
    %c56 = arith.constant 56 : index
    %c0_51 = arith.constant 0 : index
    %34 = vector.load %arg6[%c56, %c0_51] : memref<72x256xbf16, #tpu.memory_space<vmem>>, vector<4x256xbf16>
    tpu.vector_store %arg6[%c56, %c0_51], %33 {strides = array<i32>} : memref<72x256xbf16, #tpu.memory_space<vmem>>, vector<4x256xbf16>,
    %c0_52 = arith.constant 0 : index
    %c2_53 = arith.constant 2 : index
    %c2_54 = arith.constant 2 : index
    %35 = vector.load %arg5[%c0_52, %c2_53, %c2_54] : memref<4x18x18xbf16, #tpu.memory_space<vmem>>, vector<4x16x16xbf16>
    %36 = vector.shape_cast %35 : vector<4x16x16xbf16> to vector<4x256xbf16>
    %c64 = arith.constant 64 : index
    %c0_55 = arith.constant 0 : index
    %37 = vector.load %arg6[%c64, %c0_55] : memref<72x256xbf16, #tpu.memory_space<vmem>>, vector<4x256xbf16>
    tpu.vector_store %arg6[%c64, %c0_55], %36 {strides = array<i32>} : memref<72x256xbf16, #tpu.memory_space<vmem>>, vector<4x256xbf16>,
    %c0_56 = arith.constant 0 : index
    %c0_57 = arith.constant 0 : index
    %38 = vector.load %arg2[%c0_56, %c0_57] : memref<8x72xbf16, #tpu.memory_space<vmem>>, vector<8x72xbf16>
    %c0_58 = arith.constant 0 : index
    %c0_59 = arith.constant 0 : index
    %39 = vector.load %arg6[%c0_58, %c0_59] : memref<72x256xbf16, #tpu.memory_space<vmem>>, vector<72x256xbf16>
    %cst_60 = arith.constant dense<0.000000e+00> : vector<8x256xf32>
    %40 = tpu.matmul %38, %39, %cst_60 {dimension_numbers = #tpu.dot_dimension_numbers<[1], [0], [0], [1], [0, 0, 1, 1], [], []>} : vector<8x72xbf16>, vector<72x256xbf16>, vector<8x256xf32> -> vector<8x256xf32>
    %c0_61 = arith.constant 0 : index
    %c0_62 = arith.constant 0 : index
    %41 = vector.load %arg3[%c0_61, %c0_62] : memref<8x1xf32, #tpu.memory_space<vmem>>, vector<8x1xf32>
    %42 = vector.broadcast %41 : vector<8x1xf32> to vector<8x256xf32>
    %43 = arith.addf %40, %42 : vector<8x256xf32>
    %cst_63 = arith.constant 0.000000e+00 : f32
    %44 = vector.broadcast %cst_63 : f32 to vector<8x256xf32>
    %45 = arith.maximumf %43, %44 : vector<8x256xf32>
    %c0_64 = arith.constant 0 : index
    %c0_65 = arith.constant 0 : index
    %c0_66 = arith.constant 0 : index
    %46 = vector.load %arg4[%c0_64, %c0_65, %c0_66] : memref<1x8x256xf32, #tpu.memory_space<vmem>>, vector<1x8x256xf32>
    %47 = vector.shape_cast %46 : vector<1x8x256xf32> to vector<8x256xf32>
    %48 = vector.shape_cast %45 : vector<8x256xf32> to vector<1x8x256xf32>
    tpu.vector_store %arg4[%c0_64, %c0_65, %c0_66], %48 {strides = array<i32>} : memref<1x8x256xf32, #tpu.memory_space<vmem>>, vector<1x8x256xf32>,
    return
  }
  func.func @transform_0(%arg0: i32) -> (i32, i32, i32, i32) {
    %c0_i32 = arith.constant 0 : i32
    %c0_i32_0 = arith.constant 0 : i32
    %c0_i32_1 = arith.constant 0 : i32
    %c0_i32_2 = arith.constant 0 : i32
    return %arg0, %c0_i32, %c0_i32_0, %c0_i32_1 : i32, i32, i32, i32
  }
  func.func @transform_1(%arg0: i32) -> (i32, i32) {
    %c0_i32 = arith.constant 0 : i32
    %c0_i32_0 = arith.constant 0 : i32
    %c0_i32_1 = arith.constant 0 : i32
    return %c0_i32, %c0_i32_0 : i32, i32
  }
  func.func @transform_2(%arg0: i32) -> (i32, i32) {
    %c0_i32 = arith.constant 0 : i32
    %c0_i32_0 = arith.constant 0 : i32
    %c0_i32_1 = arith.constant 0 : i32
    return %c0_i32, %c0_i32_0 : i32, i32
  }
  func.func @transform_3(%arg0: i32) -> (i32, i32, i32) {
    %c0_i32 = arith.constant 0 : i32
    %c0_i32_0 = arith.constant 0 : i32
    %c0_i32_1 = arith.constant 0 : i32
    return %arg0, %c0_i32, %c0_i32_0 : i32, i32, i32
  }
}

</mosaic_0001>

<llo_original>
// kernel: tpu_custom_call.1
$region0: #{tpu_custom_call.1}
  #allocation0 [shape = 'u32[]', space=smem, size = 0x4, offset = 0x4, fixed_abs, tag = 'smem constant byte address 0x4 - core index']
  #allocation1 [shape = 'u32[144,128]{1,0:T(1,128)}', space=vmem, size = 0x12000, scoped, tag = 'internal scratch']
  #allocation2 [shape = 'bf16[4,18,18]{2,1,0:T(8,128)(2,1)}', space=vmem, size = 0x6000, scoped, tag = 'scratch operand']
  #allocation3 [shape = 'bf16[72,256]{1,0:T(8,128)(2,1)}', space=vmem, size = 0x9000, scoped, tag = 'scratch operand']
  %s0 = inlined_call_operand.hbm [shape: bf16[2,4,16,16], index: 0, kind: input, shape index: {}]
  %s1 = inlined_call_operand.vmem [shape: bf16[8,72], index: 1, kind: input, shape index: {}]
  %s2 = inlined_call_operand.vmem [shape: f32[8,1], index: 2, kind: input, shape index: {}]
  %s3 = inlined_call_operand.hbm [shape: f32[2,8,256], index: 3, kind: output, shape index: {}]
  %s4 = sld [smem:[#allocation0]]
  $region49: #{tpu_custom_call.1} parent=0
    _
  %s6 = ssub.s32 1, %s4
  %s7 = scalar_select 0, %s6, %s4
  $region1: #{tpu_custom_call.1} parent=0
    #allocation4 [shape = 'u8[32768]{0}', space=vmem, size = 0x8000, scoped, tag = 'input window, operand 0']
    #allocation5 [shape = 's32[2]{0}', space=sflag, size = 0x8, scoped, tag = 'scoped memory for tpu_custom_call.1']
    #allocation6 [shape = 's32[2]{0}', space=sflag, size = 0x8, scoped, tag = 'scoped memory for tpu_custom_call.1']
    #allocation7 [shape = 'u8[16384]{0}', space=vmem, size = 0x4000, scoped, tag = 'output window, operand 0']
    %8 = vsyncpa [#allocation5], 0
    %s9 = scalar_lea.sflag [#allocation5], 1
    %10 = vsyncpa %s9, 0
    %11 = vsyncpa [#allocation6], 0
    %s12 = scalar_lea.sflag [#allocation6], 1
    %13 = vsyncpa %s12, 0
    loop: start=0, step=1, limit=4
    $region2: #{tpu_custom_call.1} parent=1 // loop_pre_header
      _
    $region3: #{tpu_custom_call.1} parent=1 // loop_header
      %s15 = sphi 0, %s19
      %p16 = scmp.ge.s32.totalorder %s15, 4
      %s25 = sphi 0, %s27
      %s28 = sphi 0, %s25
      %s29 = sphi 0, %s28
      %s45 = sphi 0, %s29
      %s49 = sphi 0, %s49
      %s51 = sphi 0, %s49
      %s52 = sphi 0, %s51
      %s66 = sphi 0, %s52
      %s70 = sphi 0, %s70
      %s72 = sphi 0, %s70
      %s73 = sphi 0, %s72
      %s87 = sphi 0, %s73
      %s93 = sphi 0, %s95
      %s96 = sphi 0, %s93
      %s97 = sphi 0, %s96
      %s113 = sphi 0, %s97
    $region4: #{tpu_custom_call.1} parent=1 // loop_header_branch
      %18 = sbr.rel (%p16) target = $region8
    $region5: #{tpu_custom_call.1} parent=1 // loop_body
      %s20 = ssub.s32 %s15, 1
      %s21 = ssub.s32 %s15, 2
      %s22 = sadd.s32 %s15, 1
      %s23 = ssub.s32 %s15, %s22
      %p24 = scmp.eq.s32.totalorder %s23, 0
      %s26 = sadd.s32 %s25, 1
      %s27 = scalar_select %p24, %s25, %s26
      %p30 = pneg %p24
      %p31 = scmp.eq.s32.totalorder %s15, 1
      %p32 = por %p30, %p31
      %p33 = scmp.ne.s32.totalorder %s25, %s28
      %p34 = scmp.eq.s32.totalorder %s15, 0
      %p35 = por %p33, %p34
      %p36 = scmp.ne.s32.totalorder %s25, %s28
      %p37 = scmp.eq.s32.totalorder %s20, 1
      %p38 = por %p36, %p37
      %p39 = scmp.ne.s32.totalorder %s28, %s29
      %p40 = scmp.eq.s32.totalorder %s20, 0
      %p41 = por %p39, %p40
      %p42 = scmp.ne.s32.totalorder %s28, %s29
      %p43 = scmp.eq.s32.totalorder %s21, 1
      %p44 = por %p42, %p43
      %p46 = scmp.ne.s32.totalorder %s29, %s45
      %p47 = scmp.eq.s32.totalorder %s21, 0
      %p48 = por %p46, %p47
      %s50 = sadd.s32 %s49, 1
      %p53 = scmp.eq.s32.totalorder %s15, 1
      %p54 = scmp.ne.s32.totalorder %s49, %s51
      %p55 = scmp.eq.s32.totalorder %s15, 0
      %p56 = por %p54, %p55
      %p57 = scmp.ne.s32.totalorder %s49, %s51
      %p58 = scmp.eq.s32.totalorder %s20, 1
      %p59 = por %p57, %p58
      %p60 = scmp.ne.s32.totalorder %s51, %s52
      %p61 = scmp.eq.s32.totalorder %s20, 0
      %p62 = por %p60, %p61
      %p63 = scmp.ne.s32.totalorder %s51, %s52
      %p64 = scmp.eq.s32.totalorder %s21, 1
      %p65 = por %p63, %p64
      %p67 = scmp.ne.s32.totalorder %s52, %s66
      %p68 = scmp.eq.s32.totalorder %s21, 0
      %p69 = por %p67, %p68
      %s71 = sadd.s32 %s70, 1
      %p74 = scmp.eq.s32.totalorder %s15, 1
      %p75 = scmp.ne.s32.totalorder %s70, %s72
      %p76 = scmp.eq.s32.totalorder %s15, 0
      %p77 = por %p75, %p76
      %p78 = scmp.ne.s32.totalorder %s70, %s72
      %p79 = scmp.eq.s32.totalorder %s20, 1
      %p80 = por %p78, %p79
      %p81 = scmp.ne.s32.totalorder %s72, %s73
      %p82 = scmp.eq.s32.totalorder %s20, 0
      %p83 = por %p81, %p82
      %p84 = scmp.ne.s32.totalorder %s72, %s73
      %p85 = scmp.eq.s32.totalorder %s21, 1
      %p86 = por %p84, %p85
      %p88 = scmp.ne.s32.totalorder %s73, %s87
      %p89 = scmp.eq.s32.totalorder %s21, 0
      %p90 = por %p88, %p89
      %s91 = ssub.s32 %s15, %s22
      %p92 = scmp.eq.s32.totalorder %s91, 0
      %s94 = sadd.s32 %s93, 1
      %s95 = scalar_select %p92, %s93, %s94
      %p98 = pneg %p92
      %p99 = scmp.eq.s32.totalorder %s15, 1
      %p100 = por %p98, %p99
      %p101 = scmp.ne.s32.totalorder %s93, %s96
      %p102 = scmp.eq.s32.totalorder %s15, 0
      %p103 = por %p101, %p102
      %p104 = scmp.ne.s32.totalorder %s93, %s96
      %p105 = scmp.eq.s32.totalorder %s20, 1
      %p106 = por %p104, %p105
      %p107 = scmp.ne.s32.totalorder %s96, %s97
      %p108 = scmp.eq.s32.totalorder %s20, 0
      %p109 = por %p107, %p108
      %p110 = scmp.ne.s32.totalorder %s96, %s97
      %p111 = scmp.eq.s32.totalorder %s21, 1
      %p112 = por %p110, %p111
      %p114 = scmp.ne.s32.totalorder %s97, %s113
      %p115 = scmp.eq.s32.totalorder %s21, 0
      %p116 = por %p114, %p115
      %p117 = scmp.le.s32.totalorder 1, %s15
      %p118 = scmp.lt.s32.totalorder %s15, 3
      %p119 = pnand %p117, %p118
      %p120 = pneg %p119
      // Predicated region
      $region9: #{tpu_custom_call.1} parent=5 // pred_check
        _
      $region10: #{tpu_custom_call.1} parent=5 // pred_check_branch
        %122 = sbr.rel (%p119) target = $region12
      $region11: #{tpu_custom_call.1} parent=5 // pred_region
        %s123 = ssub.s32 %s15, 1
        // Predicated region
        $region13: #{tpu_custom_call.1} parent=11 // pred_check
          %p124 = pneg %p62
        $region14: #{tpu_custom_call.1} parent=11 // pred_check_branch
          %126 = sbr.rel (%p124) target = $region16
        $region15: #{tpu_custom_call.1} parent=11 // pred_region
          _
        $region16: #{tpu_custom_call.1} parent=11 // pred_fallthru
          _
        // Predicated region
        $region17: #{tpu_custom_call.1} parent=11 // pred_check
          %p127 = pneg %p83
        $region18: #{tpu_custom_call.1} parent=11 // pred_check_branch
          %129 = sbr.rel (%p127) target = $region20
        $region19: #{tpu_custom_call.1} parent=11 // pred_region
          _
        $region20: #{tpu_custom_call.1} parent=11 // pred_fallthru
          _
      $region12: #{tpu_custom_call.1} parent=5 // pred_fallthru
        _
      %p130 = scmp.lt.s32.totalorder %s15, 2
      // Predicated region
      $region21: #{tpu_custom_call.1} parent=5 // pred_check
        %p131 = pneg %p130
      $region22: #{tpu_custom_call.1} parent=5 // pred_check_branch
        %133 = sbr.rel (%p131) target = $region24
      $region23: #{tpu_custom_call.1} parent=5 // pred_region
        // Predicated region
        $region25: #{tpu_custom_call.1} parent=23 // pred_check
          %p134 = pneg %p35
        $region26: #{tpu_custom_call.1} parent=23 // pred_check_branch
          %136 = sbr.rel (%p134) target = $region28
        $region27: #{tpu_custom_call.1} parent=23 // pred_region
          %s137 = sand.u32 %s25, 1
          %s138 = scalar_lea.sflag [#allocation5], %s137
          %s139 = sand.u32 %s25, 1
          %s140 = smul.addr %s139, 32
          %s141 = scalar_lea.vmem [#allocation4], %s140
          %s143 = ssub.s32 512, 512
          %144 = vsyncadd %s138, %s143
          %s145 = smul.addr %s15, 8
          %s146 = smul.addr %s145, 64
          %s147 = scalar_lea.hbm %s0, %s146
          %s148 = sshll.u32 %s141, 4
          %s149 = int_to_ptr.vmem [resolvable:$true] %s148
          %154 = dma.hbm_to_vmem [thread:$0]  %s147, 512, %s149, %s138, 64, 64, 4
        $region28: #{tpu_custom_call.1} parent=23 // pred_fallthru
          _
      $region24: #{tpu_custom_call.1} parent=5 // pred_fallthru
        _
      %p155 = scmp.le.s32.totalorder 1, %s15
      %p156 = scmp.lt.s32.totalorder %s15, 3
      %p157 = pnand %p155, %p156
      %p158 = pneg %p157
      // Predicated region
      $region29: #{tpu_custom_call.1} parent=5 // pred_check
        _
      $region30: #{tpu_custom_call.1} parent=5 // pred_check_branch
        %160 = sbr.rel (%p157) target = $region32
      $region31: #{tpu_custom_call.1} parent=5 // pred_region
        %s161 = ssub.s32 %s15, 1
        %s162 = sand.u32 %s28, 1
        %s163 = scalar_lea.sflag [#allocation5], %s162
        %s164 = sand.u32 %s28, 1
        %s165 = smul.addr %s164, 32
        %s166 = scalar_lea.vmem [#allocation4], %s165
        // Predicated region
        $region33: #{tpu_custom_call.1} parent=31 // pred_check
          %p167 = pneg %p41
        $region34: #{tpu_custom_call.1} parent=31 // pred_check_branch
          %169 = sbr.rel (%p167) target = $region36
        $region35: #{tpu_custom_call.1} parent=31 // pred_region
          %170 = dma.done %s163, 512
        $region36: #{tpu_custom_call.1} parent=31 // pred_fallthru
          _
        %s171 = sand.u32 %s28, 1
        %s172 = scalar_lea.sflag [#allocation5], %s171
        %s173 = sand.u32 %s28, 1
        %s174 = smul.addr %s173, 32
        %s175 = scalar_lea.vmem [#allocation4], %s174
        %p176 = pneg %p41
        %p177 = pneg %p38
        %p178 = pneg %p62
        %p179 = pneg %p59
        %p180 = pneg %p83
        %p181 = pneg %p80
        %p182 = pneg %p109
        %p183 = pneg %p106
        %s184 = sand.u32 %s96, 1
        %s185 = scalar_lea.sflag [#allocation6], %s184
        %s186 = sand.u32 %s96, 1
        %s187 = smul.addr %s186, 16
        %s188 = scalar_lea.vmem [#allocation7], %s187
        %190 = vst [vmem:[#allocation3] sm:$0xff] 0
        %191 = vst [vmem:[#allocation3 + $0x8] sm:$0xff] 0
        %192 = vst [vmem:[#allocation3 + $0x10] sm:$0xff] 0
        %193 = vst [vmem:[#allocation3 + $0x18] sm:$0xff] 0
        %194 = vst [vmem:[#allocation3 + $0x20] sm:$0xff] 0
        %195 = vst [vmem:[#allocation3 + $0x28] sm:$0xff] 0
        %196 = vst [vmem:[#allocation3 + $0x30] sm:$0xff] 0
        %197 = vst [vmem:[#allocation3 + $0x38] sm:$0xff] 0
        %198 = vst [vmem:[#allocation3 + $0x40] sm:$0xff] 0
        %vm199 = vcmask 139264
        %vm200 = vsmask.f32 256
        %vm201 = vmand %vm199, %vm200
        %v202 = vld [vmem:[#allocation2] sm:$0x1]
        %v203 = vsel %vm201, 0, %v202
        %204 = vst [vmem:[#allocation2] sm:$0x1] %v203
        %v205 = vld [vmem:[#allocation2 + $0xc] sm:$0x1]
        %v206 = vsel %vm201, 0, %v205
        %207 = vst [vmem:[#allocation2 + $0xc] sm:$0x1] %v206
        %v208 = vld [vmem:[#allocation2 + $0x18] sm:$0x1]
        %v209 = vsel %vm201, 0, %v208
        %210 = vst [vmem:[#allocation2 + $0x18] sm:$0x1] %v209
        %v211 = vld [vmem:[#allocation2 + $0x24] sm:$0x1]
        %v212 = vsel %vm201, 0, %v211
        %213 = vst [vmem:[#allocation2 + $0x24] sm:$0x1] %v212
        %vm214 = vsmask.f32 7938
        %vm215 = vmand %vm199, %vm214
        %v216 = vld [vmem:[#allocation2 + $0x8] sm:$0x1]
        %v217 = vsel %vm215, 0, %v216
        %218 = vst [vmem:[#allocation2 + $0x8] sm:$0x1] %v217
        %v219 = vld [vmem:[#allocation2 + $0x14] sm:$0x1]
        %v220 = vsel %vm215, 0, %v219
        %221 = vst [vmem:[#allocation2 + $0x14] sm:$0x1] %v220
        %v222 = vld [vmem:[#allocation2 + $0x20] sm:$0x1]
        %v223 = vsel %vm215, 0, %v222
        %224 = vst [vmem:[#allocation2 + $0x20] sm:$0x1] %v223
        %v225 = vld [vmem:[#allocation2 + $0x2c] sm:$0x1]
        %v226 = vsel %vm215, 0, %v225
        %227 = vst [vmem:[#allocation2 + $0x2c] sm:$0x1] %v226
        %vm228 = vcmask 3072
        %229 = vst.msk [vmem:[#allocation2] sm:$0xf] %vm228, 0
        %230 = vst.msk [vmem:[#allocation2 + $0x4] sm:$0xf] %vm228, 0
        %vm231 = vcmask 0
        %232 = vst.msk [vmem:[#allocation2 + $0x8] sm:$0x1] %vm231, 0
        %233 = vst.msk [vmem:[#allocation2 + $0xc] sm:$0xf] %vm228, 0
        %234 = vst.msk [vmem:[#allocation2 + $0x10] sm:$0xf] %vm228, 0
        %235 = vst.msk [vmem:[#allocation2 + $0x14] sm:$0x1] %vm231, 0
        %236 = vst.msk [vmem:[#allocation2 + $0x18] sm:$0xf] %vm228, 0
        %237 = vst.msk [vmem:[#allocation2 + $0x1c] sm:$0xf] %vm228, 0
        %238 = vst.msk [vmem:[#allocation2 + $0x20] sm:$0x1] %vm231, 0
        %239 = vst.msk [vmem:[#allocation2 + $0x24] sm:$0xf] %vm228, 0
        %240 = vst.msk [vmem:[#allocation2 + $0x28] sm:$0xf] %vm228, 0
        %241 = vst.msk [vmem:[#allocation2 + $0x2c] sm:$0x1] %vm231, 0
        %vm242 = vcmask 142472
        %243 = vst.msk [vmem:[#allocation2] sm:$0xf] %vm242, 0
        %244 = vst.msk [vmem:[#allocation2 + $0x4] sm:$0xf] %vm242, 0
        %vm245 = vcmask 139400
        %246 = vst.msk [vmem:[#allocation2 + $0x8] sm:$0x1] %vm245, 0
        %247 = vst.msk [vmem:[#allocation2 + $0xc] sm:$0xf] %vm242, 0
        %248 = vst.msk [vmem:[#allocation2 + $0x10] sm:$0xf] %vm242, 0
        %249 = vst.msk [vmem:[#allocation2 + $0x14] sm:$0x1] %vm245, 0
        %250 = vst.msk [vmem:[#allocation2 + $0x18] sm:$0xf] %vm242, 0
        %251 = vst.msk [vmem:[#allocation2 + $0x1c] sm:$0xf] %vm242, 0
        %252 = vst.msk [vmem:[#allocation2 + $0x20] sm:$0x1] %vm245, 0
        %253 = vst.msk [vmem:[#allocation2 + $0x24] sm:$0xf] %vm242, 0
        %254 = vst.msk [vmem:[#allocation2 + $0x28] sm:$0xf] %vm242, 0
        %255 = vst.msk [vmem:[#allocation2 + $0x2c] sm:$0x1] %vm245, 0
        %v256 = vld [vmem:[%s166] sm:$0xf]
        %v257 = vld [vmem:[%s166 + $0x4] sm:$0xf]
        %v258 = vld [vmem:[%s166 + $0x8] sm:$0xf]
        %v259 = vld [vmem:[%s166 + $0xc] sm:$0xf]
        %v260 = vld [vmem:[%s166 + $0x10] sm:$0xf]
        %v261 = vld [vmem:[%s166 + $0x14] sm:$0xf]
        %v262 = vld [vmem:[%s166 + $0x18] sm:$0xf]
        %v263 = vld [vmem:[%s166 + $0x1c] sm:$0xf]
        %vm264 = vsmask.f32 4368
        %vm265 = vmor %vm200, %vm264
        %v267 = vshrl.u32 %v256, 16
        %v269 = vrot.slane %v267, 7
        %v270 = vshll.u32 %v256, 16
        %v272 = vor.u32 %v269, %v270
        %v273 = vrot.slane %v269, 4
        %v275 = vshrl.u32 %v257, 16
        %v277 = vrot.slane %v275, 7
        %v278 = vshll.u32 %v257, 16
        %v280 = vor.u32 %v277, %v278
        %v281 = vsel %vm265, %v273, %v280
        %v282 = vrot.slane %v277, 4
        %v284 = vshrl.u32 %v258, 16
        %v286 = vrot.slane %v284, 7
        %v287 = vshll.u32 %v258, 16
        %v289 = vor.u32 %v286, %v287
        %v290 = vrot.slane %v286, 4
        %v292 = vshrl.u32 %v259, 16
        %v294 = vrot.slane %v292, 7
        %v295 = vshll.u32 %v259, 16
        %v297 = vor.u32 %v294, %v295
        %v298 = vsel %vm265, %v290, %v297
        %v299 = vrot.slane %v294, 4
        %v301 = vshrl.u32 %v260, 16
        %v303 = vrot.slane %v301, 7
        %v304 = vshll.u32 %v260, 16
        %v306 = vor.u32 %v303, %v304
        %v307 = vrot.slane %v303, 4
        %v309 = vshrl.u32 %v261, 16
        %v311 = vrot.slane %v309, 7
        %v312 = vshll.u32 %v261, 16
        %v314 = vor.u32 %v311, %v312
        %v315 = vsel %vm265, %v307, %v314
        %v316 = vrot.slane %v311, 4
        %v318 = vshrl.u32 %v262, 16
        %v320 = vrot.slane %v318, 7
        %v321 = vshll.u32 %v262, 16
        %v323 = vor.u32 %v320, %v321
        %v324 = vrot.slane %v320, 4
        %v326 = vshrl.u32 %v263, 16
        %v328 = vrot.slane %v326, 7
        %v329 = vshll.u32 %v263, 16
        %v331 = vor.u32 %v328, %v329
        %v332 = vsel %vm265, %v324, %v331
        %v333 = vrot.slane %v328, 4
        %334 = vrot.lane.b32.xlu0 %v272, 1
        %v335 = vpop.permute.xlu0 %334
        %336 = vrot.lane.b32.xlu0 %v281, 1
        %v337 = vpop.permute.xlu0 %336
        %338 = vrot.lane.b32.xlu0 %v282, 1
        %v339 = vpop.permute.xlu0 %338
        %340 = vrot.lane.b32.xlu0 %v289, 1
        %v341 = vpop.permute.xlu0 %340
        %342 = vrot.lane.b32.xlu0 %v298, 1
        %v343 = vpop.permute.xlu0 %342
        %344 = vrot.lane.b32.xlu0 %v299, 1
        %v345 = vpop.permute.xlu0 %344
        %346 = vrot.lane.b32.xlu0 %v306, 1
        %v347 = vpop.permute.xlu0 %346
        %348 = vrot.lane.b32.xlu0 %v315, 1
        %v349 = vpop.permute.xlu0 %348
        %350 = vrot.lane.b32.xlu0 %v316, 1
        %v351 = vpop.permute.xlu0 %350
        %352 = vrot.lane.b32.xlu0 %v323, 1
        %v353 = vpop.permute.xlu0 %352
        %354 = vrot.lane.b32.xlu0 %v332, 1
        %v355 = vpop.permute.xlu0 %354
        %356 = vrot.lane.b32.xlu0 %v333, 1
        %v357 = vpop.permute.xlu0 %356
        %vm370 = vcmask 134152
        %vm371 = vmand %vm370, %vm214
        %v372 = vld [vmem:[#allocation2] sm:$0xf]
        %v373 = vsel %vm371, %v335, %v372
        %374 = vst [vmem:[#allocation2] sm:$0xf] %v373
        %vm375 = vcmask 134152
        %376 = vst.msk [vmem:[#allocation2 + $0x4] sm:$0xf] %vm375, %v337
        %vm377 = vcmask 131080
        %vm378 = vmand %vm377, %vm200
        %v379 = vld [vmem:[#allocation2 + $0x8] sm:$0x1]
        %v380 = vsel %vm378, %v339, %v379
        %381 = vst [vmem:[#allocation2 + $0x8] sm:$0x1] %v380
        %v382 = vld [vmem:[#allocation2 + $0xc] sm:$0xf]
        %v383 = vsel %vm371, %v341, %v382
        %384 = vst [vmem:[#allocation2 + $0xc] sm:$0xf] %v383
        %385 = vst.msk [vmem:[#allocation2 + $0x10] sm:$0xf] %vm375, %v343
        %v386 = vld [vmem:[#allocation2 + $0x14] sm:$0x1]
        %v387 = vsel %vm378, %v345, %v386
        %388 = vst [vmem:[#allocation2 + $0x14] sm:$0x1] %v387
        %v389 = vld [vmem:[#allocation2 + $0x18] sm:$0xf]
        %v390 = vsel %vm371, %v347, %v389
        %391 = vst [vmem:[#allocation2 + $0x18] sm:$0xf] %v390
        %392 = vst.msk [vmem:[#allocation2 + $0x1c] sm:$0xf] %vm375, %v349
        %v393 = vld [vmem:[#allocation2 + $0x20] sm:$0x1]
        %v394 = vsel %vm378, %v351, %v393
        %395 = vst [vmem:[#allocation2 + $0x20] sm:$0x1] %v394
        %v396 = vld [vmem:[#allocation2 + $0x24] sm:$0xf]
        %v397 = vsel %vm371, %v353, %v396
        %398 = vst [vmem:[#allocation2 + $0x24] sm:$0xf] %v397
        %399 = vst.msk [vmem:[#allocation2 + $0x28] sm:$0xf] %vm375, %v355
        %v400 = vld [vmem:[#allocation2 + $0x2c] sm:$0x1]
        %v401 = vsel %vm378, %v357, %v400
        %402 = vst [vmem:[#allocation2 + $0x2c] sm:$0x1] %v401
        %v403 = vld [vmem:[#allocation2] sm:$0xf]
        %v404 = vld [vmem:[#allocation2 + $0x4] sm:$0xf]
        %v405 = vld [vmem:[#allocation2 + $0xc] sm:$0xf]
        %v406 = vld [vmem:[#allocation2 + $0x10] sm:$0xf]
        %v407 = vld [vmem:[#allocation2 + $0x18] sm:$0xf]
        %v408 = vld [vmem:[#allocation2 + $0x1c] sm:$0xf]
        %v409 = vld [vmem:[#allocation2 + $0x24] sm:$0xf]
        %v410 = vld [vmem:[#allocation2 + $0x28] sm:$0xf]
        %v413 = vpack.i.b16 %v405, %v403
        %v414 = vshrl.u32 %v403, 16
        %v415 = vshrl.u32 %v405, 16
        %v416 = vpack.i.b16 %v415, %v414
        %v419 = vpack.i.b16 %v409, %v407
        %v420 = vshrl.u32 %v407, 16
        %v421 = vshrl.u32 %v409, 16
        %v422 = vpack.i.b16 %v421, %v420
        %v425 = vpack.i.b16 %v406, %v404
        %v426 = vshrl.u32 %v404, 16
        %v427 = vshrl.u32 %v406, 16
        %v428 = vpack.i.b16 %v427, %v426
        %v431 = vpack.i.b16 %v410, %v408
        %v432 = vshrl.u32 %v408, 16
        %v433 = vshrl.u32 %v410, 16
        %v434 = vpack.i.b16 %v433, %v432
        %v437 = vunpack.c.l.s4 1983009808
        %v438 = vunpack.c.0.s8 %v437
        %v439 = vlaneseq
        %v440 = vshrl.u32 %v439, 7
        %v441 = vsub.s32 %v438, %v440
        %v442 = vrot.slane %v413, %v441
        %v445 = vunpack.c.l.s4 1983009808
        %v446 = vunpack.c.0.s8 %v445
        %v447 = vlaneseq
        %v448 = vshrl.u32 %v447, 7
        %v449 = vsub.s32 %v446, %v448
        %v450 = vrot.slane %v419, %v449
        %v451 = vcombine.low %v442, %v450
        %v452 = vcombine.high %v442, %v450
        %v454 = vunpack.c.l.s4 1934713408
        %v455 = vunpack.c.0.s8 %v454
        %v456 = vlaneseq
        %v457 = vshrl.u32 %v456, 7
        %v458 = vsub.s32 %v455, %v457
        %v459 = vrot.slane %v451, %v458
        %v461 = vunpack.c.l.s4 1934713408
        %v462 = vunpack.c.0.s8 %v461
        %v463 = vlaneseq
        %v464 = vshrl.u32 %v463, 7
        %v465 = vsub.s32 %v462, %v464
        %v466 = vrot.slane %v452, %v465
        %v467 = vcombine.high %v459, 0
        %v468 = vcombine.high %v466, 0
        %v471 = vunpack.c.l.s4 1983009808
        %v472 = vunpack.c.0.s8 %v471
        %v473 = vlaneseq
        %v474 = vshrl.u32 %v473, 7
        %v475 = vsub.s32 %v472, %v474
        %v476 = vrot.slane %v416, %v475
        %v479 = vunpack.c.l.s4 1983009808
        %v480 = vunpack.c.0.s8 %v479
        %v481 = vlaneseq
        %v482 = vshrl.u32 %v481, 7
        %v483 = vsub.s32 %v480, %v482
        %v484 = vrot.slane %v422, %v483
        %v485 = vcombine.low %v476, %v484
        %v486 = vcombine.high %v476, %v484
        %v488 = vunpack.c.l.s4 1934713408
        %v489 = vunpack.c.0.s8 %v488
        %v490 = vlaneseq
        %v491 = vshrl.u32 %v490, 7
        %v492 = vsub.s32 %v489, %v491
        %v493 = vrot.slane %v485, %v492
        %v495 = vunpack.c.l.s4 1934713408
        %v496 = vunpack.c.0.s8 %v495
        %v497 = vlaneseq
        %v498 = vshrl.u32 %v497, 7
        %v499 = vsub.s32 %v496, %v498
        %v500 = vrot.slane %v486, %v499
        %v501 = vcombine.high %v493, 0
        %v502 = vcombine.high %v500, 0
        %v505 = vunpack.c.l.s4 1983009808
        %v506 = vunpack.c.0.s8 %v505
        %v507 = vlaneseq
        %v508 = vshrl.u32 %v507, 7
        %v509 = vsub.s32 %v506, %v508
        %v510 = vrot.slane %v425, %v509
        %v513 = vunpack.c.l.s4 1983009808
        %v514 = vunpack.c.0.s8 %v513
        %v515 = vlaneseq
        %v516 = vshrl.u32 %v515, 7
        %v517 = vsub.s32 %v514, %v516
        %v518 = vrot.slane %v431, %v517
        %v519 = vcombine.low %v510, %v518
        %v520 = vcombine.high %v510, %v518
        %v522 = vunpack.c.l.s4 1934713408
        %v523 = vunpack.c.0.s8 %v522
        %v524 = vlaneseq
        %v525 = vshrl.u32 %v524, 7
        %v526 = vsub.s32 %v523, %v525
        %v527 = vrot.slane %v519, %v526
        %v529 = vunpack.c.l.s4 1934713408
        %v530 = vunpack.c.0.s8 %v529
        %v531 = vlaneseq
        %v532 = vshrl.u32 %v531, 7
        %v533 = vsub.s32 %v530, %v532
        %v534 = vrot.slane %v520, %v533
        %v535 = vcombine.high %v527, 0
        %v536 = vcombine.high %v534, 0
        %v539 = vunpack.c.l.s4 1983009808
        %v540 = vunpack.c.0.s8 %v539
        %v541 = vlaneseq
        %v542 = vshrl.u32 %v541, 7
        %v543 = vsub.s32 %v540, %v542
        %v544 = vrot.slane %v428, %v543
        %v547 = vunpack.c.l.s4 1983009808
        %v548 = vunpack.c.0.s8 %v547
        %v549 = vlaneseq
        %v550 = vshrl.u32 %v549, 7
        %v551 = vsub.s32 %v548, %v550
        %v552 = vrot.slane %v434, %v551
        %v553 = vcombine.low %v544, %v552
        %v554 = vcombine.high %v544, %v552
        %v556 = vunpack.c.l.s4 1934713408
        %v557 = vunpack.c.0.s8 %v556
        %v558 = vlaneseq
        %v559 = vshrl.u32 %v558, 7
        %v560 = vsub.s32 %v557, %v559
        %v561 = vrot.slane %v553, %v560
        %v563 = vunpack.c.l.s4 1934713408
        %v564 = vunpack.c.0.s8 %v563
        %v565 = vlaneseq
        %v566 = vshrl.u32 %v565, 7
        %v567 = vsub.s32 %v564, %v566
        %v568 = vrot.slane %v554, %v567
        %v569 = vcombine.high %v561, 0
        %v570 = vcombine.high %v568, 0
        %v572 = vunpack.c.l.b16 %v493
        %v573 = vpack.c.b16 %v572, %v572
        %574 = vrot.lane.b32.xlu0 %v573, 16
        %v575 = vpop.permute.xlu0 %574
        %v577 = vunpack.c.l.b16 %v467
        %v578 = vpack.c.b16 %v577, %v577
        %579 = vrot.lane.b32.xlu0 %v578, 32
        %v580 = vpop.permute.xlu0 %579
        %v582 = vunpack.c.l.b16 %v501
        %v583 = vpack.c.b16 %v582, %v582
        %584 = vrot.lane.b32.xlu0 %v583, 48
        %v585 = vpop.permute.xlu0 %584
        %v587 = vunpack.c.l.b16 %v466
        %v588 = vpack.c.b16 %v587, %v587
        %589 = vrot.lane.b32.xlu0 %v588, 64
        %v590 = vpop.permute.xlu0 %589
        %v592 = vunpack.c.l.b16 %v500
        %v593 = vpack.c.b16 %v592, %v592
        %594 = vrot.lane.b32.xlu0 %v593, 80
        %v595 = vpop.permute.xlu0 %594
        %v597 = vunpack.c.l.b16 %v468
        %v598 = vpack.c.b16 %v597, %v597
        %599 = vrot.lane.b32.xlu0 %v598, 96
        %v600 = vpop.permute.xlu0 %599
        %v602 = vunpack.c.l.b16 %v502
        %v603 = vpack.c.b16 %v602, %v602
        %604 = vrot.lane.b32.xlu0 %v603, 112
        %v605 = vpop.permute.xlu0 %604
        %v607 = vunpack.c.l.b16 %v561
        %v608 = vpack.c.b16 %v607, %v607
        %609 = vrot.lane.b32.xlu0 %v608, 16
        %v610 = vpop.permute.xlu0 %609
        %v612 = vunpack.c.l.b16 %v535
        %v613 = vpack.c.b16 %v612, %v612
        %614 = vrot.lane.b32.xlu0 %v613, 32
        %v615 = vpop.permute.xlu0 %614
        %v617 = vunpack.c.l.b16 %v569
        %v618 = vpack.c.b16 %v617, %v617
        %619 = vrot.lane.b32.xlu0 %v618, 48
        %v620 = vpop.permute.xlu0 %619
        %v622 = vunpack.c.l.b16 %v534
        %v623 = vpack.c.b16 %v622, %v622
        %624 = vrot.lane.b32.xlu0 %v623, 64
        %v625 = vpop.permute.xlu0 %624
        %v627 = vunpack.c.l.b16 %v568
        %v628 = vpack.c.b16 %v627, %v627
        %629 = vrot.lane.b32.xlu0 %v628, 80
        %v630 = vpop.permute.xlu0 %629
        %v632 = vunpack.c.l.b16 %v536
        %v633 = vpack.c.b16 %v632, %v632
        %634 = vrot.lane.b32.xlu0 %v633, 96
        %v635 = vpop.permute.xlu0 %634
        %v637 = vunpack.c.l.b16 %v570
        %v638 = vpack.c.b16 %v637, %v637
        %639 = vrot.lane.b32.xlu0 %v638, 112
        %v640 = vpop.permute.xlu0 %639
        %vm641 = vcmask 130048
        %v644 = vsel %vm641, %v459, %v575
        %vm645 = vcmask 261120
        %v647 = vsel %vm645, %v644, %v580
        %vm648 = vcmask 392192
        %v650 = vsel %vm648, %v647, %v585
        %vm651 = vcmask 523264
        %v653 = vsel %vm651, %v650, %v590
        %vm654 = vcmask 654336
        %v656 = vsel %vm654, %v653, %v595
        %vm657 = vcmask 785408
        %v659 = vsel %vm657, %v656, %v600
        %vm660 = vcmask 916480
        %v662 = vsel %vm660, %v659, %v605
        %v665 = vsel %vm641, %v527, %v610
        %v667 = vsel %vm645, %v665, %v615
        %v669 = vsel %vm648, %v667, %v620
        %v671 = vsel %vm651, %v669, %v625
        %v673 = vsel %vm654, %v671, %v630
        %v675 = vsel %vm657, %v673, %v635
        %v677 = vsel %vm660, %v675, %v640
        %v680 = vunpack.c.l.b16 %v662
        %v681 = vunpack.c.l.b16 %v677
        %v682 = vpack.c.b16 %v681, %v680
        %684 = vst [vmem:[#allocation3] sm:$0x33] %v682
        %v685 = vld [vmem:[#allocation2] sm:$0xf]
        %v686 = vld [vmem:[#allocation2 + $0x4] sm:$0xf]
        %v687 = vld [vmem:[#allocation2 + $0xc] sm:$0xf]
        %v688 = vld [vmem:[#allocation2 + $0x10] sm:$0xf]
        %v689 = vld [vmem:[#allocation2 + $0x18] sm:$0xf]
        %v690 = vld [vmem:[#allocation2 + $0x1c] sm:$0xf]
        %v691 = vld [vmem:[#allocation2 + $0x24] sm:$0xf]
        %v692 = vld [vmem:[#allocation2 + $0x28] sm:$0xf]
        %701 = vrot.lane.b32.xlu0 %v685, 127
        %v702 = vpop.permute.xlu0 %701
        %703 = vrot.lane.b32.xlu0 %v686, 127
        %v704 = vpop.permute.xlu0 %703
        %705 = vrot.lane.b32.xlu0 %v687, 127
        %v706 = vpop.permute.xlu0 %705
        %707 = vrot.lane.b32.xlu0 %v688, 127
        %v708 = vpop.permute.xlu0 %707
        %709 = vrot.lane.b32.xlu0 %v689, 127
        %v710 = vpop.permute.xlu0 %709
        %711 = vrot.lane.b32.xlu0 %v690, 127
        %v712 = vpop.permute.xlu0 %711
        %713 = vrot.lane.b32.xlu0 %v691, 127
        %v714 = vpop.permute.xlu0 %713
        %715 = vrot.lane.b32.xlu0 %v692, 127
        %v716 = vpop.permute.xlu0 %715
        %v719 = vpack.i.b16 %v706, %v702
        %v720 = vshrl.u32 %v702, 16
        %v721 = vshrl.u32 %v706, 16
        %v722 = vpack.i.b16 %v721, %v720
        %v725 = vpack.i.b16 %v714, %v710
        %v726 = vshrl.u32 %v710, 16
        %v727 = vshrl.u32 %v714, 16
        %v728 = vpack.i.b16 %v727, %v726
        %v731 = vpack.i.b16 %v708, %v704
        %v732 = vshrl.u32 %v704, 16
        %v733 = vshrl.u32 %v708, 16
        %v734 = vpack.i.b16 %v733, %v732
        %v737 = vpack.i.b16 %v716, %v712
        %v738 = vshrl.u32 %v712, 16
        %v739 = vshrl.u32 %v716, 16
        %v740 = vpack.i.b16 %v739, %v738
        %v743 = vunpack.c.l.s4 1983009808
        %v744 = vunpack.c.0.s8 %v743
        %v745 = vlaneseq
        %v746 = vshrl.u32 %v745, 7
        %v747 = vsub.s32 %v744, %v746
        %v748 = vrot.slane %v719, %v747
        %v751 = vunpack.c.l.s4 1983009808
        %v752 = vunpack.c.0.s8 %v751
        %v753 = vlaneseq
        %v754 = vshrl.u32 %v753, 7
        %v755 = vsub.s32 %v752, %v754
        %v756 = vrot.slane %v725, %v755
        %v757 = vcombine.low %v748, %v756
        %v758 = vcombine.high %v748, %v756
        %v760 = vunpack.c.l.s4 1934713408
        %v761 = vunpack.c.0.s8 %v760
        %v762 = vlaneseq
        %v763 = vshrl.u32 %v762, 7
        %v764 = vsub.s32 %v761, %v763
        %v765 = vrot.slane %v757, %v764
        %v767 = vunpack.c.l.s4 1934713408
        %v768 = vunpack.c.0.s8 %v767
        %v769 = vlaneseq
        %v770 = vshrl.u32 %v769, 7
        %v771 = vsub.s32 %v768, %v770
        %v772 = vrot.slane %v758, %v771
        %v773 = vcombine.high %v765, 0
        %v774 = vcombine.high %v772, 0
        %v777 = vunpack.c.l.s4 1983009808
        %v778 = vunpack.c.0.s8 %v777
        %v779 = vlaneseq
        %v780 = vshrl.u32 %v779, 7
        %v781 = vsub.s32 %v778, %v780
        %v782 = vrot.slane %v722, %v781
        %v785 = vunpack.c.l.s4 1983009808
        %v786 = vunpack.c.0.s8 %v785
        %v787 = vlaneseq
        %v788 = vshrl.u32 %v787, 7
        %v789 = vsub.s32 %v786, %v788
        %v790 = vrot.slane %v728, %v789
        %v791 = vcombine.low %v782, %v790
        %v792 = vcombine.high %v782, %v790
        %v794 = vunpack.c.l.s4 1934713408
        %v795 = vunpack.c.0.s8 %v794
        %v796 = vlaneseq
        %v797 = vshrl.u32 %v796, 7
        %v798 = vsub.s32 %v795, %v797
        %v799 = vrot.slane %v791, %v798
        %v801 = vunpack.c.l.s4 1934713408
        %v802 = vunpack.c.0.s8 %v801
        %v803 = vlaneseq
        %v804 = vshrl.u32 %v803, 7
        %v805 = vsub.s32 %v802, %v804
        %v806 = vrot.slane %v792, %v805
        %v807 = vcombine.high %v799, 0
        %v808 = vcombine.high %v806, 0
        %v811 = vunpack.c.l.s4 1983009808
        %v812 = vunpack.c.0.s8 %v811
        %v813 = vlaneseq
        %v814 = vshrl.u32 %v813, 7
        %v815 = vsub.s32 %v812, %v814
        %v816 = vrot.slane %v731, %v815
        %v819 = vunpack.c.l.s4 1983009808
        %v820 = vunpack.c.0.s8 %v819
        %v821 = vlaneseq
        %v822 = vshrl.u32 %v821, 7
        %v823 = vsub.s32 %v820, %v822
        %v824 = vrot.slane %v737, %v823
        %v825 = vcombine.low %v816, %v824
        %v826 = vcombine.high %v816, %v824
        %v828 = vunpack.c.l.s4 1934713408
        %v829 = vunpack.c.0.s8 %v828
        %v830 = vlaneseq
        %v831 = vshrl.u32 %v830, 7
        %v832 = vsub.s32 %v829, %v831
        %v833 = vrot.slane %v825, %v832
        %v835 = vunpack.c.l.s4 1934713408
        %v836 = vunpack.c.0.s8 %v835
        %v837 = vlaneseq
        %v838 = vshrl.u32 %v837, 7
        %v839 = vsub.s32 %v836, %v838
        %v840 = vrot.slane %v826, %v839
        %v841 = vcombine.high %v833, 0
        %v842 = vcombine.high %v840, 0
        %v845 = vunpack.c.l.s4 1983009808
        %v846 = vunpack.c.0.s8 %v845
        %v847 = vlaneseq
        %v848 = vshrl.u32 %v847, 7
        %v849 = vsub.s32 %v846, %v848
        %v850 = vrot.slane %v734, %v849
        %v853 = vunpack.c.l.s4 1983009808
        %v854 = vunpack.c.0.s8 %v853
        %v855 = vlaneseq
        %v856 = vshrl.u32 %v855, 7
        %v857 = vsub.s32 %v854, %v856
        %v858 = vrot.slane %v740, %v857
        %v859 = vcombine.low %v850, %v858
        %v860 = vcombine.high %v850, %v858
        %v862 = vunpack.c.l.s4 1934713408
        %v863 = vunpack.c.0.s8 %v862
        %v864 = vlaneseq
        %v865 = vshrl.u32 %v864, 7
        %v866 = vsub.s32 %v863, %v865
        %v867 = vrot.slane %v859, %v866
        %v869 = vunpack.c.l.s4 1934713408
        %v870 = vunpack.c.0.s8 %v869
        %v871 = vlaneseq
        %v872 = vshrl.u32 %v871, 7
        %v873 = vsub.s32 %v870, %v872
        %v874 = vrot.slane %v860, %v873
        %v875 = vcombine.high %v867, 0
        %v876 = vcombine.high %v874, 0
        %v878 = vunpack.c.l.b16 %v799
        %v879 = vpack.c.b16 %v878, %v878
        %880 = vrot.lane.b32.xlu0 %v879, 16
        %v881 = vpop.permute.xlu0 %880
        %v883 = vunpack.c.l.b16 %v773
        %v884 = vpack.c.b16 %v883, %v883
        %885 = vrot.lane.b32.xlu0 %v884, 32
        %v886 = vpop.permute.xlu0 %885
        %v888 = vunpack.c.l.b16 %v807
        %v889 = vpack.c.b16 %v888, %v888
        %890 = vrot.lane.b32.xlu0 %v889, 48
        %v891 = vpop.permute.xlu0 %890
        %v893 = vunpack.c.l.b16 %v772
        %v894 = vpack.c.b16 %v893, %v893
        %895 = vrot.lane.b32.xlu0 %v894, 64
        %v896 = vpop.permute.xlu0 %895
        %v898 = vunpack.c.l.b16 %v806
        %v899 = vpack.c.b16 %v898, %v898
        %900 = vrot.lane.b32.xlu0 %v899, 80
        %v901 = vpop.permute.xlu0 %900
        %v903 = vunpack.c.l.b16 %v774
        %v904 = vpack.c.b16 %v903, %v903
        %905 = vrot.lane.b32.xlu0 %v904, 96
        %v906 = vpop.permute.xlu0 %905
        %v908 = vunpack.c.l.b16 %v808
        %v909 = vpack.c.b16 %v908, %v908
        %910 = vrot.lane.b32.xlu0 %v909, 112
        %v911 = vpop.permute.xlu0 %910
        %v913 = vunpack.c.l.b16 %v867
        %v914 = vpack.c.b16 %v913, %v913
        %915 = vrot.lane.b32.xlu0 %v914, 16
        %v916 = vpop.permute.xlu0 %915
        %v918 = vunpack.c.l.b16 %v841
        %v919 = vpack.c.b16 %v918, %v918
        %920 = vrot.lane.b32.xlu0 %v919, 32
        %v921 = vpop.permute.xlu0 %920
        %v923 = vunpack.c.l.b16 %v875
        %v924 = vpack.c.b16 %v923, %v923
        %925 = vrot.lane.b32.xlu0 %v924, 48
        %v926 = vpop.permute.xlu0 %925
        %v928 = vunpack.c.l.b16 %v840
        %v929 = vpack.c.b16 %v928, %v928
        %930 = vrot.lane.b32.xlu0 %v929, 64
        %v931 = vpop.permute.xlu0 %930
        %v933 = vunpack.c.l.b16 %v874
        %v934 = vpack.c.b16 %v933, %v933
        %935 = vrot.lane.b32.xlu0 %v934, 80
        %v936 = vpop.permute.xlu0 %935
        %v938 = vunpack.c.l.b16 %v842
        %v939 = vpack.c.b16 %v938, %v938
        %940 = vrot.lane.b32.xlu0 %v939, 96
        %v941 = vpop.permute.xlu0 %940
        %v943 = vunpack.c.l.b16 %v876
        %v944 = vpack.c.b16 %v943, %v943
        %945 = vrot.lane.b32.xlu0 %v944, 112
        %v946 = vpop.permute.xlu0 %945
        %v949 = vsel %vm641, %v765, %v881
        %v951 = vsel %vm645, %v949, %v886
        %v953 = vsel %vm648, %v951, %v891
        %v955 = vsel %vm651, %v953, %v896
        %v957 = vsel %vm654, %v955, %v901
        %v959 = vsel %vm657, %v957, %v906
        %v961 = vsel %vm660, %v959, %v911
        %v964 = vsel %vm641, %v833, %v916
        %v966 = vsel %vm645, %v964, %v921
        %v968 = vsel %vm648, %v966, %v926
        %v970 = vsel %vm651, %v968, %v931
        %v972 = vsel %vm654, %v970, %v936
        %v974 = vsel %vm657, %v972, %v941
        %v976 = vsel %vm660, %v974, %v946
        %v979 = vunpack.c.l.b16 %v961
        %v980 = vunpack.c.l.b16 %v976
        %v981 = vpack.c.b16 %v980, %v979
        %983 = vst [vmem:[#allocation3 + $0x8] sm:$0x33] %v981
        %v984 = vld [vmem:[#allocation2] sm:$0xf]
        %v985 = vld [vmem:[#allocation2 + $0x4] sm:$0xf]
        %v986 = vld [vmem:[#allocation2 + $0xc] sm:$0xf]
        %v987 = vld [vmem:[#allocation2 + $0x10] sm:$0xf]
        %v988 = vld [vmem:[#allocation2 + $0x18] sm:$0xf]
        %v989 = vld [vmem:[#allocation2 + $0x1c] sm:$0xf]
        %v990 = vld [vmem:[#allocation2 + $0x24] sm:$0xf]
        %v991 = vld [vmem:[#allocation2 + $0x28] sm:$0xf]
        %1000 = vrot.lane.b32.xlu0 %v984, 126
        %v1001 = vpop.permute.xlu0 %1000
        %1002 = vrot.lane.b32.xlu0 %v985, 126
        %v1003 = vpop.permute.xlu0 %1002
        %1004 = vrot.lane.b32.xlu0 %v986, 126
        %v1005 = vpop.permute.xlu0 %1004
        %1006 = vrot.lane.b32.xlu0 %v987, 126
        %v1007 = vpop.permute.xlu0 %1006
        %1008 = vrot.lane.b32.xlu0 %v988, 126
        %v1009 = vpop.permute.xlu0 %1008
        %1010 = vrot.lane.b32.xlu0 %v989, 126
        %v1011 = vpop.permute.xlu0 %1010
        %1012 = vrot.lane.b32.xlu0 %v990, 126
        %v1013 = vpop.permute.xlu0 %1012
        %1014 = vrot.lane.b32.xlu0 %v991, 126
        %v1015 = vpop.permute.xlu0 %1014
        %v1018 = vpack.i.b16 %v1005, %v1001
        %v1019 = vshrl.u32 %v1001, 16
        %v1020 = vshrl.u32 %v1005, 16
        %v1021 = vpack.i.b16 %v1020, %v1019
        %v1024 = vpack.i.b16 %v1013, %v1009
        %v1025 = vshrl.u32 %v1009, 16
        %v1026 = vshrl.u32 %v1013, 16
        %v1027 = vpack.i.b16 %v1026, %v1025
        %v1030 = vpack.i.b16 %v1007, %v1003
        %v1031 = vshrl.u32 %v1003, 16
        %v1032 = vshrl.u32 %v1007, 16
        %v1033 = vpack.i.b16 %v1032, %v1031
        %v1036 = vpack.i.b16 %v1015, %v1011
        %v1037 = vshrl.u32 %v1011, 16
        %v1038 = vshrl.u32 %v1015, 16
        %v1039 = vpack.i.b16 %v1038, %v1037
        %v1042 = vunpack.c.l.s4 1983009808
        %v1043 = vunpack.c.0.s8 %v1042
        %v1044 = vlaneseq
        %v1045 = vshrl.u32 %v1044, 7
        %v1046 = vsub.s32 %v1043, %v1045
        %v1047 = vrot.slane %v1018, %v1046
        %v1050 = vunpack.c.l.s4 1983009808
        %v1051 = vunpack.c.0.s8 %v1050
        %v1052 = vlaneseq
        %v1053 = vshrl.u32 %v1052, 7
        %v1054 = vsub.s32 %v1051, %v1053
        %v1055 = vrot.slane %v1024, %v1054
        %v1056 = vcombine.low %v1047, %v1055
        %v1057 = vcombine.high %v1047, %v1055
        %v1059 = vunpack.c.l.s4 1934713408
        %v1060 = vunpack.c.0.s8 %v1059
        %v1061 = vlaneseq
        %v1062 = vshrl.u32 %v1061, 7
        %v1063 = vsub.s32 %v1060, %v1062
        %v1064 = vrot.slane %v1056, %v1063
        %v1066 = vunpack.c.l.s4 1934713408
        %v1067 = vunpack.c.0.s8 %v1066
        %v1068 = vlaneseq
        %v1069 = vshrl.u32 %v1068, 7
        %v1070 = vsub.s32 %v1067, %v1069
        %v1071 = vrot.slane %v1057, %v1070
        %v1072 = vcombine.high %v1064, 0
        %v1073 = vcombine.high %v1071, 0
        %v1076 = vunpack.c.l.s4 1983009808
        %v1077 = vunpack.c.0.s8 %v1076
        %v1078 = vlaneseq
        %v1079 = vshrl.u32 %v1078, 7
        %v1080 = vsub.s32 %v1077, %v1079
        %v1081 = vrot.slane %v1021, %v1080
        %v1084 = vunpack.c.l.s4 1983009808
        %v1085 = vunpack.c.0.s8 %v1084
        %v1086 = vlaneseq
        %v1087 = vshrl.u32 %v1086, 7
        %v1088 = vsub.s32 %v1085, %v1087
        %v1089 = vrot.slane %v1027, %v1088
        %v1090 = vcombine.low %v1081, %v1089
        %v1091 = vcombine.high %v1081, %v1089
        %v1093 = vunpack.c.l.s4 1934713408
        %v1094 = vunpack.c.0.s8 %v1093
        %v1095 = vlaneseq
        %v1096 = vshrl.u32 %v1095, 7
        %v1097 = vsub.s32 %v1094, %v1096
        %v1098 = vrot.slane %v1090, %v1097
        %v1100 = vunpack.c.l.s4 1934713408
        %v1101 = vunpack.c.0.s8 %v1100
        %v1102 = vlaneseq
        %v1103 = vshrl.u32 %v1102, 7
        %v1104 = vsub.s32 %v1101, %v1103
        %v1105 = vrot.slane %v1091, %v1104
        %v1106 = vcombine.high %v1098, 0
        %v1107 = vcombine.high %v1105, 0
        %v1110 = vunpack.c.l.s4 1983009808
        %v1111 = vunpack.c.0.s8 %v1110
        %v1112 = vlaneseq
        %v1113 = vshrl.u32 %v1112, 7
        %v1114 = vsub.s32 %v1111, %v1113
        %v1115 = vrot.slane %v1030, %v1114
        %v1118 = vunpack.c.l.s4 1983009808
        %v1119 = vunpack.c.0.s8 %v1118
        %v1120 = vlaneseq
        %v1121 = vshrl.u32 %v1120, 7
        %v1122 = vsub.s32 %v1119, %v1121
        %v1123 = vrot.slane %v1036, %v1122
        %v1124 = vcombine.low %v1115, %v1123
        %v1125 = vcombine.high %v1115, %v1123
        %v1127 = vunpack.c.l.s4 1934713408
        %v1128 = vunpack.c.0.s8 %v1127
        %v1129 = vlaneseq
        %v1130 = vshrl.u32 %v1129, 7
        %v1131 = vsub.s32 %v1128, %v1130
        %v1132 = vrot.slane %v1124, %v1131
        %v1134 = vunpack.c.l.s4 1934713408
        %v1135 = vunpack.c.0.s8 %v1134
        %v1136 = vlaneseq
        %v1137 = vshrl.u32 %v1136, 7
        %v1138 = vsub.s32 %v1135, %v1137
        %v1139 = vrot.slane %v1125, %v1138
        %v1140 = vcombine.high %v1132, 0
        %v1141 = vcombine.high %v1139, 0
        %v1144 = vunpack.c.l.s4 1983009808
        %v1145 = vunpack.c.0.s8 %v1144
        %v1146 = vlaneseq
        %v1147 = vshrl.u32 %v1146, 7
        %v1148 = vsub.s32 %v1145, %v1147
        %v1149 = vrot.slane %v1033, %v1148
        %v1152 = vunpack.c.l.s4 1983009808
        %v1153 = vunpack.c.0.s8 %v1152
        %v1154 = vlaneseq
        %v1155 = vshrl.u32 %v1154, 7
        %v1156 = vsub.s32 %v1153, %v1155
        %v1157 = vrot.slane %v1039, %v1156
        %v1158 = vcombine.low %v1149, %v1157
        %v1159 = vcombine.high %v1149, %v1157
        %v1161 = vunpack.c.l.s4 1934713408
        %v1162 = vunpack.c.0.s8 %v1161
        %v1163 = vlaneseq
        %v1164 = vshrl.u32 %v1163, 7
        %v1165 = vsub.s32 %v1162, %v1164
        %v1166 = vrot.slane %v1158, %v1165
        %v1168 = vunpack.c.l.s4 1934713408
        %v1169 = vunpack.c.0.s8 %v1168
        %v1170 = vlaneseq
        %v1171 = vshrl.u32 %v1170, 7
        %v1172 = vsub.s32 %v1169, %v1171
        %v1173 = vrot.slane %v1159, %v1172
        %v1174 = vcombine.high %v1166, 0
        %v1175 = vcombine.high %v1173, 0
        %v1177 = vunpack.c.l.b16 %v1098
        %v1178 = vpack.c.b16 %v1177, %v1177
        %1179 = vrot.lane.b32.xlu0 %v1178, 16
        %v1180 = vpop.permute.xlu0 %1179
        %v1182 = vunpack.c.l.b16 %v1072
        %v1183 = vpack.c.b16 %v1182, %v1182
        %1184 = vrot.lane.b32.xlu0 %v1183, 32
        %v1185 = vpop.permute.xlu0 %1184
        %v1187 = vunpack.c.l.b16 %v1106
        %v1188 = vpack.c.b16 %v1187, %v1187
        %1189 = vrot.lane.b32.xlu0 %v1188, 48
        %v1190 = vpop.permute.xlu0 %1189
        %v1192 = vunpack.c.l.b16 %v1071
        %v1193 = vpack.c.b16 %v1192, %v1192
        %1194 = vrot.lane.b32.xlu0 %v1193, 64
        %v1195 = vpop.permute.xlu0 %1194
        %v1197 = vunpack.c.l.b16 %v1105
        %v1198 = vpack.c.b16 %v1197, %v1197
        %1199 = vrot.lane.b32.xlu0 %v1198, 80
        %v1200 = vpop.permute.xlu0 %1199
        %v1202 = vunpack.c.l.b16 %v1073
        %v1203 = vpack.c.b16 %v1202, %v1202
        %1204 = vrot.lane.b32.xlu0 %v1203, 96
        %v1205 = vpop.permute.xlu0 %1204
        %v1207 = vunpack.c.l.b16 %v1107
        %v1208 = vpack.c.b16 %v1207, %v1207
        %1209 = vrot.lane.b32.xlu0 %v1208, 112
        %v1210 = vpop.permute.xlu0 %1209
        %v1212 = vunpack.c.l.b16 %v1166
        %v1213 = vpack.c.b16 %v1212, %v1212
        %1214 = vrot.lane.b32.xlu0 %v1213, 16
        %v1215 = vpop.permute.xlu0 %1214
        %v1217 = vunpack.c.l.b16 %v1140
        %v1218 = vpack.c.b16 %v1217, %v1217
        %1219 = vrot.lane.b32.xlu0 %v1218, 32
        %v1220 = vpop.permute.xlu0 %1219
        %v1222 = vunpack.c.l.b16 %v1174
        %v1223 = vpack.c.b16 %v1222, %v1222
        %1224 = vrot.lane.b32.xlu0 %v1223, 48
        %v1225 = vpop.permute.xlu0 %1224
        %v1227 = vunpack.c.l.b16 %v1139
        %v1228 = vpack.c.b16 %v1227, %v1227
        %1229 = vrot.lane.b32.xlu0 %v1228, 64
        %v1230 = vpop.permute.xlu0 %1229
        %v1232 = vunpack.c.l.b16 %v1173
        %v1233 = vpack.c.b16 %v1232, %v1232
        %1234 = vrot.lane.b32.xlu0 %v1233, 80
        %v1235 = vpop.permute.xlu0 %1234
        %v1237 = vunpack.c.l.b16 %v1141
        %v1238 = vpack.c.b16 %v1237, %v1237
        %1239 = vrot.lane.b32.xlu0 %v1238, 96
        %v1240 = vpop.permute.xlu0 %1239
        %v1242 = vunpack.c.l.b16 %v1175
        %v1243 = vpack.c.b16 %v1242, %v1242
        %1244 = vrot.lane.b32.xlu0 %v1243, 112
        %v1245 = vpop.permute.xlu0 %1244
        %v1248 = vsel %vm641, %v1064, %v1180
        %v1250 = vsel %vm645, %v1248, %v1185
        %v1252 = vsel %vm648, %v1250, %v1190
        %v1254 = vsel %vm651, %v1252, %v1195
        %v1256 = vsel %vm654, %v1254, %v1200
        %v1258 = vsel %vm657, %v1256, %v1205
        %v1260 = vsel %vm660, %v1258, %v1210
        %v1263 = vsel %vm641, %v1132, %v1215
        %v1265 = vsel %vm645, %v1263, %v1220
        %v1267 = vsel %vm648, %v1265, %v1225
        %v1269 = vsel %vm651, %v1267, %v1230
        %v1271 = vsel %vm654, %v1269, %v1235
        %v1273 = vsel %vm657, %v1271, %v1240
        %v1275 = vsel %vm660, %v1273, %v1245
        %v1278 = vunpack.c.l.b16 %v1260
        %v1279 = vunpack.c.l.b16 %v1275
        %v1280 = vpack.c.b16 %v1279, %v1278
        %1282 = vst [vmem:[#allocation3 + $0x10] sm:$0x33] %v1280
        %v1283 = vld [vmem:[#allocation2] sm:$0xf]
        %v1284 = vld [vmem:[#allocation2 + $0x4] sm:$0xf]
        %v1285 = vld [vmem:[#allocation2 + $0x8] sm:$0x1]
        %v1286 = vld [vmem:[#allocation2 + $0xc] sm:$0xf]
        %v1287 = vld [vmem:[#allocation2 + $0x10] sm:$0xf]
        %v1288 = vld [vmem:[#allocation2 + $0x14] sm:$0x1]
        %v1289 = vld [vmem:[#allocation2 + $0x18] sm:$0xf]
        %v1290 = vld [vmem:[#allocation2 + $0x1c] sm:$0xf]
        %v1291 = vld [vmem:[#allocation2 + $0x20] sm:$0x1]
        %v1292 = vld [vmem:[#allocation2 + $0x24] sm:$0xf]
        %v1293 = vld [vmem:[#allocation2 + $0x28] sm:$0xf]
        %v1294 = vld [vmem:[#allocation2 + $0x2c] sm:$0x1]
        %vm1295 = vsmask.f32 3328
        %vm1296 = vsmask.f32 7440
        %vm1297 = vmor %vm1295, %vm1296
        %v1299 = vshrl.u32 %v1283, 16
        %v1301 = vrot.slane %v1299, 4
        %v1302 = vshll.u32 %v1283, 16
        %v1304 = vrot.slane %v1302, 5
        %v1305 = vor.u32 %v1301, %v1304
        %v1306 = vrot.slane %v1305, 4
        %v1308 = vshll.u32 %v1284, 16
        %v1310 = vrot.slane %v1308, 5
        %v1311 = vsel %vm1297, %v1306, %v1310
        %v1312 = vshrl.u32 %v1284, 16
        %v1314 = vrot.slane %v1312, 4
        %v1315 = vor.u32 %v1314, %v1310
        %v1316 = vrot.slane %v1315, 4
        %v1318 = vshll.u32 %v1285, 16
        %v1320 = vrot.slane %v1318, 5
        %v1321 = vsel %vm1297, %v1316, %v1320
        %v1323 = vshrl.u32 %v1286, 16
        %v1325 = vrot.slane %v1323, 4
        %v1326 = vshll.u32 %v1286, 16
        %v1328 = vrot.slane %v1326, 5
        %v1329 = vor.u32 %v1325, %v1328
        %v1330 = vrot.slane %v1329, 4
        %v1332 = vshll.u32 %v1287, 16
        %v1334 = vrot.slane %v1332, 5
        %v1335 = vsel %vm1297, %v1330, %v1334
        %v1336 = vshrl.u32 %v1287, 16
        %v1338 = vrot.slane %v1336, 4
        %v1339 = vor.u32 %v1338, %v1334
        %v1340 = vrot.slane %v1339, 4
        %v1342 = vshll.u32 %v1288, 16
        %v1344 = vrot.slane %v1342, 5
        %v1345 = vsel %vm1297, %v1340, %v1344
        %v1347 = vshrl.u32 %v1289, 16
        %v1349 = vrot.slane %v1347, 4
        %v1350 = vshll.u32 %v1289, 16
        %v1352 = vrot.slane %v1350, 5
        %v1353 = vor.u32 %v1349, %v1352
        %v1354 = vrot.slane %v1353, 4
        %v1356 = vshll.u32 %v1290, 16
        %v1358 = vrot.slane %v1356, 5
        %v1359 = vsel %vm1297, %v1354, %v1358
        %v1360 = vshrl.u32 %v1290, 16
        %v1362 = vrot.slane %v1360, 4
        %v1363 = vor.u32 %v1362, %v1358
        %v1364 = vrot.slane %v1363, 4
        %v1366 = vshll.u32 %v1291, 16
        %v1368 = vrot.slane %v1366, 5
        %v1369 = vsel %vm1297, %v1364, %v1368
        %v1371 = vshrl.u32 %v1292, 16
        %v1373 = vrot.slane %v1371, 4
        %v1374 = vshll.u32 %v1292, 16
        %v1376 = vrot.slane %v1374, 5
        %v1377 = vor.u32 %v1373, %v1376
        %v1378 = vrot.slane %v1377, 4
        %v1380 = vshll.u32 %v1293, 16
        %v1382 = vrot.slane %v1380, 5
        %v1383 = vsel %vm1297, %v1378, %v1382
        %v1384 = vshrl.u32 %v1293, 16
        %v1386 = vrot.slane %v1384, 4
        %v1387 = vor.u32 %v1386, %v1382
        %v1388 = vrot.slane %v1387, 4
        %v1390 = vshll.u32 %v1294, 16
        %v1392 = vrot.slane %v1390, 5
        %v1393 = vsel %vm1297, %v1388, %v1392
        %v1396 = vpack.i.b16 %v1335, %v1311
        %v1397 = vshrl.u32 %v1311, 16
        %v1398 = vshrl.u32 %v1335, 16
        %v1399 = vpack.i.b16 %v1398, %v1397
        %v1402 = vpack.i.b16 %v1383, %v1359
        %v1403 = vshrl.u32 %v1359, 16
        %v1404 = vshrl.u32 %v1383, 16
        %v1405 = vpack.i.b16 %v1404, %v1403
        %v1408 = vpack.i.b16 %v1345, %v1321
        %v1409 = vshrl.u32 %v1321, 16
        %v1410 = vshrl.u32 %v1345, 16
        %v1411 = vpack.i.b16 %v1410, %v1409
        %v1414 = vpack.i.b16 %v1393, %v1369
        %v1415 = vshrl.u32 %v1369, 16
        %v1416 = vshrl.u32 %v1393, 16
        %v1417 = vpack.i.b16 %v1416, %v1415
        %v1420 = vunpack.c.l.s4 1983009808
        %v1421 = vunpack.c.0.s8 %v1420
        %v1422 = vlaneseq
        %v1423 = vshrl.u32 %v1422, 7
        %v1424 = vsub.s32 %v1421, %v1423
        %v1425 = vrot.slane %v1396, %v1424
        %v1428 = vunpack.c.l.s4 1983009808
        %v1429 = vunpack.c.0.s8 %v1428
        %v1430 = vlaneseq
        %v1431 = vshrl.u32 %v1430, 7
        %v1432 = vsub.s32 %v1429, %v1431
        %v1433 = vrot.slane %v1402, %v1432
        %v1434 = vcombine.low %v1425, %v1433
        %v1435 = vcombine.high %v1425, %v1433
        %v1437 = vunpack.c.l.s4 1934713408
        %v1438 = vunpack.c.0.s8 %v1437
        %v1439 = vlaneseq
        %v1440 = vshrl.u32 %v1439, 7
        %v1441 = vsub.s32 %v1438, %v1440
        %v1442 = vrot.slane %v1434, %v1441
        %v1444 = vunpack.c.l.s4 1934713408
        %v1445 = vunpack.c.0.s8 %v1444
        %v1446 = vlaneseq
        %v1447 = vshrl.u32 %v1446, 7
        %v1448 = vsub.s32 %v1445, %v1447
        %v1449 = vrot.slane %v1435, %v1448
        %v1450 = vcombine.high %v1442, 0
        %v1451 = vcombine.high %v1449, 0
        %v1454 = vunpack.c.l.s4 1983009808
        %v1455 = vunpack.c.0.s8 %v1454
        %v1456 = vlaneseq
        %v1457 = vshrl.u32 %v1456, 7
        %v1458 = vsub.s32 %v1455, %v1457
        %v1459 = vrot.slane %v1399, %v1458
        %v1462 = vunpack.c.l.s4 1983009808
        %v1463 = vunpack.c.0.s8 %v1462
        %v1464 = vlaneseq
        %v1465 = vshrl.u32 %v1464, 7
        %v1466 = vsub.s32 %v1463, %v1465
        %v1467 = vrot.slane %v1405, %v1466
        %v1468 = vcombine.low %v1459, %v1467
        %v1469 = vcombine.high %v1459, %v1467
        %v1471 = vunpack.c.l.s4 1934713408
        %v1472 = vunpack.c.0.s8 %v1471
        %v1473 = vlaneseq
        %v1474 = vshrl.u32 %v1473, 7
        %v1475 = vsub.s32 %v1472, %v1474
        %v1476 = vrot.slane %v1468, %v1475
        %v1478 = vunpack.c.l.s4 1934713408
        %v1479 = vunpack.c.0.s8 %v1478
        %v1480 = vlaneseq
        %v1481 = vshrl.u32 %v1480, 7
        %v1482 = vsub.s32 %v1479, %v1481
        %v1483 = vrot.slane %v1469, %v1482
        %v1484 = vcombine.high %v1476, 0
        %v1485 = vcombine.high %v1483, 0
        %v1488 = vunpack.c.l.s4 1983009808
        %v1489 = vunpack.c.0.s8 %v1488
        %v1490 = vlaneseq
        %v1491 = vshrl.u32 %v1490, 7
        %v1492 = vsub.s32 %v1489, %v1491
        %v1493 = vrot.slane %v1408, %v1492
        %v1496 = vunpack.c.l.s4 1983009808
        %v1497 = vunpack.c.0.s8 %v1496
        %v1498 = vlaneseq
        %v1499 = vshrl.u32 %v1498, 7
        %v1500 = vsub.s32 %v1497, %v1499
        %v1501 = vrot.slane %v1414, %v1500
        %v1502 = vcombine.low %v1493, %v1501
        %v1503 = vcombine.high %v1493, %v1501
        %v1505 = vunpack.c.l.s4 1934713408
        %v1506 = vunpack.c.0.s8 %v1505
        %v1507 = vlaneseq
        %v1508 = vshrl.u32 %v1507, 7
        %v1509 = vsub.s32 %v1506, %v1508
        %v1510 = vrot.slane %v1502, %v1509
        %v1512 = vunpack.c.l.s4 1934713408
        %v1513 = vunpack.c.0.s8 %v1512
        %v1514 = vlaneseq
        %v1515 = vshrl.u32 %v1514, 7
        %v1516 = vsub.s32 %v1513, %v1515
        %v1517 = vrot.slane %v1503, %v1516
        %v1518 = vcombine.high %v1510, 0
        %v1519 = vcombine.high %v1517, 0
        %v1522 = vunpack.c.l.s4 1983009808
        %v1523 = vunpack.c.0.s8 %v1522
        %v1524 = vlaneseq
        %v1525 = vshrl.u32 %v1524, 7
        %v1526 = vsub.s32 %v1523, %v1525
        %v1527 = vrot.slane %v1411, %v1526
        %v1530 = vunpack.c.l.s4 1983009808
        %v1531 = vunpack.c.0.s8 %v1530
        %v1532 = vlaneseq
        %v1533 = vshrl.u32 %v1532, 7
        %v1534 = vsub.s32 %v1531, %v1533
        %v1535 = vrot.slane %v1417, %v1534
        %v1536 = vcombine.low %v1527, %v1535
        %v1537 = vcombine.high %v1527, %v1535
        %v1539 = vunpack.c.l.s4 1934713408
        %v1540 = vunpack.c.0.s8 %v1539
        %v1541 = vlaneseq
        %v1542 = vshrl.u32 %v1541, 7
        %v1543 = vsub.s32 %v1540, %v1542
        %v1544 = vrot.slane %v1536, %v1543
        %v1546 = vunpack.c.l.s4 1934713408
        %v1547 = vunpack.c.0.s8 %v1546
        %v1548 = vlaneseq
        %v1549 = vshrl.u32 %v1548, 7
        %v1550 = vsub.s32 %v1547, %v1549
        %v1551 = vrot.slane %v1537, %v1550
        %v1552 = vcombine.high %v1544, 0
        %v1553 = vcombine.high %v1551, 0
        %v1555 = vunpack.c.l.b16 %v1476
        %v1556 = vpack.c.b16 %v1555, %v1555
        %1557 = vrot.lane.b32.xlu0 %v1556, 16
        %v1558 = vpop.permute.xlu0 %1557
        %v1560 = vunpack.c.l.b16 %v1450
        %v1561 = vpack.c.b16 %v1560, %v1560
        %1562 = vrot.lane.b32.xlu0 %v1561, 32
        %v1563 = vpop.permute.xlu0 %1562
        %v1565 = vunpack.c.l.b16 %v1484
        %v1566 = vpack.c.b16 %v1565, %v1565
        %1567 = vrot.lane.b32.xlu0 %v1566, 48
        %v1568 = vpop.permute.xlu0 %1567
        %v1570 = vunpack.c.l.b16 %v1449
        %v1571 = vpack.c.b16 %v1570, %v1570
        %1572 = vrot.lane.b32.xlu0 %v1571, 64
        %v1573 = vpop.permute.xlu0 %1572
        %v1575 = vunpack.c.l.b16 %v1483
        %v1576 = vpack.c.b16 %v1575, %v1575
        %1577 = vrot.lane.b32.xlu0 %v1576, 80
        %v1578 = vpop.permute.xlu0 %1577
        %v1580 = vunpack.c.l.b16 %v1451
        %v1581 = vpack.c.b16 %v1580, %v1580
        %1582 = vrot.lane.b32.xlu0 %v1581, 96
        %v1583 = vpop.permute.xlu0 %1582
        %v1585 = vunpack.c.l.b16 %v1485
        %v1586 = vpack.c.b16 %v1585, %v1585
        %1587 = vrot.lane.b32.xlu0 %v1586, 112
        %v1588 = vpop.permute.xlu0 %1587
        %v1590 = vunpack.c.l.b16 %v1544
        %v1591 = vpack.c.b16 %v1590, %v1590
        %1592 = vrot.lane.b32.xlu0 %v1591, 16
        %v1593 = vpop.permute.xlu0 %1592
        %v1595 = vunpack.c.l.b16 %v1518
        %v1596 = vpack.c.b16 %v1595, %v1595
        %1597 = vrot.lane.b32.xlu0 %v1596, 32
        %v1598 = vpop.permute.xlu0 %1597
        %v1600 = vunpack.c.l.b16 %v1552
        %v1601 = vpack.c.b16 %v1600, %v1600
        %1602 = vrot.lane.b32.xlu0 %v1601, 48
        %v1603 = vpop.permute.xlu0 %1602
        %v1605 = vunpack.c.l.b16 %v1517
        %v1606 = vpack.c.b16 %v1605, %v1605
        %1607 = vrot.lane.b32.xlu0 %v1606, 64
        %v1608 = vpop.permute.xlu0 %1607
        %v1610 = vunpack.c.l.b16 %v1551
        %v1611 = vpack.c.b16 %v1610, %v1610
        %1612 = vrot.lane.b32.xlu0 %v1611, 80
        %v1613 = vpop.permute.xlu0 %1612
        %v1615 = vunpack.c.l.b16 %v1519
        %v1616 = vpack.c.b16 %v1615, %v1615
        %1617 = vrot.lane.b32.xlu0 %v1616, 96
        %v1618 = vpop.permute.xlu0 %1617
        %v1620 = vunpack.c.l.b16 %v1553
        %v1621 = vpack.c.b16 %v1620, %v1620
        %1622 = vrot.lane.b32.xlu0 %v1621, 112
        %v1623 = vpop.permute.xlu0 %1622
        %v1626 = vsel %vm641, %v1442, %v1558
        %v1628 = vsel %vm645, %v1626, %v1563
        %v1630 = vsel %vm648, %v1628, %v1568
        %v1632 = vsel %vm651, %v1630, %v1573
        %v1634 = vsel %vm654, %v1632, %v1578
        %v1636 = vsel %vm657, %v1634, %v1583
        %v1638 = vsel %vm660, %v1636, %v1588
        %v1641 = vsel %vm641, %v1510, %v1593
        %v1643 = vsel %vm645, %v1641, %v1598
        %v1645 = vsel %vm648, %v1643, %v1603
        %v1647 = vsel %vm651, %v1645, %v1608
        %v1649 = vsel %vm654, %v1647, %v1613
        %v1651 = vsel %vm657, %v1649, %v1618
        %v1653 = vsel %vm660, %v1651, %v1623
        %v1656 = vunpack.c.l.b16 %v1638
        %v1657 = vunpack.c.l.b16 %v1653
        %v1658 = vpack.c.b16 %v1657, %v1656
        %1660 = vst [vmem:[#allocation3 + $0x18] sm:$0x33] %v1658
        %v1661 = vld [vmem:[#allocation2] sm:$0xf]
        %v1662 = vld [vmem:[#allocation2 + $0x4] sm:$0xf]
        %v1663 = vld [vmem:[#allocation2 + $0x8] sm:$0x1]
        %v1664 = vld [vmem:[#allocation2 + $0xc] sm:$0xf]
        %v1665 = vld [vmem:[#allocation2 + $0x10] sm:$0xf]
        %v1666 = vld [vmem:[#allocation2 + $0x14] sm:$0x1]
        %v1667 = vld [vmem:[#allocation2 + $0x18] sm:$0xf]
        %v1668 = vld [vmem:[#allocation2 + $0x1c] sm:$0xf]
        %v1669 = vld [vmem:[#allocation2 + $0x20] sm:$0x1]
        %v1670 = vld [vmem:[#allocation2 + $0x24] sm:$0xf]
        %v1671 = vld [vmem:[#allocation2 + $0x28] sm:$0xf]
        %v1672 = vld [vmem:[#allocation2 + $0x2c] sm:$0x1]
        %v1674 = vshrl.u32 %v1661, 16
        %v1676 = vrot.slane %v1674, 4
        %v1677 = vshll.u32 %v1661, 16
        %v1679 = vrot.slane %v1677, 5
        %v1680 = vor.u32 %v1676, %v1679
        %v1681 = vrot.slane %v1680, 4
        %v1683 = vshll.u32 %v1662, 16
        %v1685 = vrot.slane %v1683, 5
        %v1686 = vsel %vm1297, %v1681, %v1685
        %v1687 = vshrl.u32 %v1662, 16
        %v1689 = vrot.slane %v1687, 4
        %v1690 = vor.u32 %v1689, %v1685
        %v1691 = vrot.slane %v1690, 4
        %v1693 = vshll.u32 %v1663, 16
        %v1695 = vrot.slane %v1693, 5
        %v1696 = vsel %vm1297, %v1691, %v1695
        %v1698 = vshrl.u32 %v1664, 16
        %v1700 = vrot.slane %v1698, 4
        %v1701 = vshll.u32 %v1664, 16
        %v1703 = vrot.slane %v1701, 5
        %v1704 = vor.u32 %v1700, %v1703
        %v1705 = vrot.slane %v1704, 4
        %v1707 = vshll.u32 %v1665, 16
        %v1709 = vrot.slane %v1707, 5
        %v1710 = vsel %vm1297, %v1705, %v1709
        %v1711 = vshrl.u32 %v1665, 16
        %v1713 = vrot.slane %v1711, 4
        %v1714 = vor.u32 %v1713, %v1709
        %v1715 = vrot.slane %v1714, 4
        %v1717 = vshll.u32 %v1666, 16
        %v1719 = vrot.slane %v1717, 5
        %v1720 = vsel %vm1297, %v1715, %v1719
        %v1722 = vshrl.u32 %v1667, 16
        %v1724 = vrot.slane %v1722, 4
        %v1725 = vshll.u32 %v1667, 16
        %v1727 = vrot.slane %v1725, 5
        %v1728 = vor.u32 %v1724, %v1727
        %v1729 = vrot.slane %v1728, 4
        %v1731 = vshll.u32 %v1668, 16
        %v1733 = vrot.slane %v1731, 5
        %v1734 = vsel %vm1297, %v1729, %v1733
        %v1735 = vshrl.u32 %v1668, 16
        %v1737 = vrot.slane %v1735, 4
        %v1738 = vor.u32 %v1737, %v1733
        %v1739 = vrot.slane %v1738, 4
        %v1741 = vshll.u32 %v1669, 16
        %v1743 = vrot.slane %v1741, 5
        %v1744 = vsel %vm1297, %v1739, %v1743
        %v1746 = vshrl.u32 %v1670, 16
        %v1748 = vrot.slane %v1746, 4
        %v1749 = vshll.u32 %v1670, 16
        %v1751 = vrot.slane %v1749, 5
        %v1752 = vor.u32 %v1748, %v1751
        %v1753 = vrot.slane %v1752, 4
        %v1755 = vshll.u32 %v1671, 16
        %v1757 = vrot.slane %v1755, 5
        %v1758 = vsel %vm1297, %v1753, %v1757
        %v1759 = vshrl.u32 %v1671, 16
        %v1761 = vrot.slane %v1759, 4
        %v1762 = vor.u32 %v1761, %v1757
        %v1763 = vrot.slane %v1762, 4
        %v1765 = vshll.u32 %v1672, 16
        %v1767 = vrot.slane %v1765, 5
        %v1768 = vsel %vm1297, %v1763, %v1767
        %1769 = vrot.lane.b32.xlu0 %v1686, 127
        %v1770 = vpop.permute.xlu0 %1769
        %1771 = vrot.lane.b32.xlu0 %v1696, 127
        %v1772 = vpop.permute.xlu0 %1771
        %1773 = vrot.lane.b32.xlu0 %v1710, 127
        %v1774 = vpop.permute.xlu0 %1773
        %1775 = vrot.lane.b32.xlu0 %v1720, 127
        %v1776 = vpop.permute.xlu0 %1775
        %1777 = vrot.lane.b32.xlu0 %v1734, 127
        %v1778 = vpop.permute.xlu0 %1777
        %1779 = vrot.lane.b32.xlu0 %v1744, 127
        %v1780 = vpop.permute.xlu0 %1779
        %1781 = vrot.lane.b32.xlu0 %v1758, 127
        %v1782 = vpop.permute.xlu0 %1781
        %1783 = vrot.lane.b32.xlu0 %v1768, 127
        %v1784 = vpop.permute.xlu0 %1783
        %v1787 = vpack.i.b16 %v1774, %v1770
        %v1788 = vshrl.u32 %v1770, 16
        %v1789 = vshrl.u32 %v1774, 16
        %v1790 = vpack.i.b16 %v1789, %v1788
        %v1793 = vpack.i.b16 %v1782, %v1778
        %v1794 = vshrl.u32 %v1778, 16
        %v1795 = vshrl.u32 %v1782, 16
        %v1796 = vpack.i.b16 %v1795, %v1794
        %v1799 = vpack.i.b16 %v1776, %v1772
        %v1800 = vshrl.u32 %v1772, 16
        %v1801 = vshrl.u32 %v1776, 16
        %v1802 = vpack.i.b16 %v1801, %v1800
        %v1805 = vpack.i.b16 %v1784, %v1780
        %v1806 = vshrl.u32 %v1780, 16
        %v1807 = vshrl.u32 %v1784, 16
        %v1808 = vpack.i.b16 %v1807, %v1806
        %v1811 = vunpack.c.l.s4 1983009808
        %v1812 = vunpack.c.0.s8 %v1811
        %v1813 = vlaneseq
        %v1814 = vshrl.u32 %v1813, 7
        %v1815 = vsub.s32 %v1812, %v1814
        %v1816 = vrot.slane %v1787, %v1815
        %v1819 = vunpack.c.l.s4 1983009808
        %v1820 = vunpack.c.0.s8 %v1819
        %v1821 = vlaneseq
        %v1822 = vshrl.u32 %v1821, 7
        %v1823 = vsub.s32 %v1820, %v1822
        %v1824 = vrot.slane %v1793, %v1823
        %v1825 = vcombine.low %v1816, %v1824
        %v1826 = vcombine.high %v1816, %v1824
        %v1828 = vunpack.c.l.s4 1934713408
        %v1829 = vunpack.c.0.s8 %v1828
        %v1830 = vlaneseq
        %v1831 = vshrl.u32 %v1830, 7
        %v1832 = vsub.s32 %v1829, %v1831
        %v1833 = vrot.slane %v1825, %v1832
        %v1835 = vunpack.c.l.s4 1934713408
        %v1836 = vunpack.c.0.s8 %v1835
        %v1837 = vlaneseq
        %v1838 = vshrl.u32 %v1837, 7
        %v1839 = vsub.s32 %v1836, %v1838
        %v1840 = vrot.slane %v1826, %v1839
        %v1841 = vcombine.high %v1833, 0
        %v1842 = vcombine.high %v1840, 0
        %v1845 = vunpack.c.l.s4 1983009808
        %v1846 = vunpack.c.0.s8 %v1845
        %v1847 = vlaneseq
        %v1848 = vshrl.u32 %v1847, 7
        %v1849 = vsub.s32 %v1846, %v1848
        %v1850 = vrot.slane %v1790, %v1849
        %v1853 = vunpack.c.l.s4 1983009808
        %v1854 = vunpack.c.0.s8 %v1853
        %v1855 = vlaneseq
        %v1856 = vshrl.u32 %v1855, 7
        %v1857 = vsub.s32 %v1854, %v1856
        %v1858 = vrot.slane %v1796, %v1857
        %v1859 = vcombine.low %v1850, %v1858
        %v1860 = vcombine.high %v1850, %v1858
        %v1862 = vunpack.c.l.s4 1934713408
        %v1863 = vunpack.c.0.s8 %v1862
        %v1864 = vlaneseq
        %v1865 = vshrl.u32 %v1864, 7
        %v1866 = vsub.s32 %v1863, %v1865
        %v1867 = vrot.slane %v1859, %v1866
        %v1869 = vunpack.c.l.s4 1934713408
        %v1870 = vunpack.c.0.s8 %v1869
        %v1871 = vlaneseq
        %v1872 = vshrl.u32 %v1871, 7
        %v1873 = vsub.s32 %v1870, %v1872
        %v1874 = vrot.slane %v1860, %v1873
        %v1875 = vcombine.high %v1867, 0
        %v1876 = vcombine.high %v1874, 0
        %v1879 = vunpack.c.l.s4 1983009808
        %v1880 = vunpack.c.0.s8 %v1879
        %v1881 = vlaneseq
        %v1882 = vshrl.u32 %v1881, 7
        %v1883 = vsub.s32 %v1880, %v1882
        %v1884 = vrot.slane %v1799, %v1883
        %v1887 = vunpack.c.l.s4 1983009808
        %v1888 = vunpack.c.0.s8 %v1887
        %v1889 = vlaneseq
        %v1890 = vshrl.u32 %v1889, 7
        %v1891 = vsub.s32 %v1888, %v1890
        %v1892 = vrot.slane %v1805, %v1891
        %v1893 = vcombine.low %v1884, %v1892
        %v1894 = vcombine.high %v1884, %v1892
        %v1896 = vunpack.c.l.s4 1934713408
        %v1897 = vunpack.c.0.s8 %v1896
        %v1898 = vlaneseq
        %v1899 = vshrl.u32 %v1898, 7
        %v1900 = vsub.s32 %v1897, %v1899
        %v1901 = vrot.slane %v1893, %v1900
        %v1903 = vunpack.c.l.s4 1934713408
        %v1904 = vunpack.c.0.s8 %v1903
        %v1905 = vlaneseq
        %v1906 = vshrl.u32 %v1905, 7
        %v1907 = vsub.s32 %v1904, %v1906
        %v1908 = vrot.slane %v1894, %v1907
        %v1909 = vcombine.high %v1901, 0
        %v1910 = vcombine.high %v1908, 0
        %v1913 = vunpack.c.l.s4 1983009808
        %v1914 = vunpack.c.0.s8 %v1913
        %v1915 = vlaneseq
        %v1916 = vshrl.u32 %v1915, 7
        %v1917 = vsub.s32 %v1914, %v1916
        %v1918 = vrot.slane %v1802, %v1917
        %v1921 = vunpack.c.l.s4 1983009808
        %v1922 = vunpack.c.0.s8 %v1921
        %v1923 = vlaneseq
        %v1924 = vshrl.u32 %v1923, 7
        %v1925 = vsub.s32 %v1922, %v1924
        %v1926 = vrot.slane %v1808, %v1925
        %v1927 = vcombine.low %v1918, %v1926
        %v1928 = vcombine.high %v1918, %v1926
        %v1930 = vunpack.c.l.s4 1934713408
        %v1931 = vunpack.c.0.s8 %v1930
        %v1932 = vlaneseq
        %v1933 = vshrl.u32 %v1932, 7
        %v1934 = vsub.s32 %v1931, %v1933
        %v1935 = vrot.slane %v1927, %v1934
        %v1937 = vunpack.c.l.s4 1934713408
        %v1938 = vunpack.c.0.s8 %v1937
        %v1939 = vlaneseq
        %v1940 = vshrl.u32 %v1939, 7
        %v1941 = vsub.s32 %v1938, %v1940
        %v1942 = vrot.slane %v1928, %v1941
        %v1943 = vcombine.high %v1935, 0
        %v1944 = vcombine.high %v1942, 0
        %v1946 = vunpack.c.l.b16 %v1867
        %v1947 = vpack.c.b16 %v1946, %v1946
        %1948 = vrot.lane.b32.xlu0 %v1947, 16
        %v1949 = vpop.permute.xlu0 %1948
        %v1951 = vunpack.c.l.b16 %v1841
        %v1952 = vpack.c.b16 %v1951, %v1951
        %1953 = vrot.lane.b32.xlu0 %v1952, 32
        %v1954 = vpop.permute.xlu0 %1953
        %v1956 = vunpack.c.l.b16 %v1875
        %v1957 = vpack.c.b16 %v1956, %v1956
        %1958 = vrot.lane.b32.xlu0 %v1957, 48
        %v1959 = vpop.permute.xlu0 %1958
        %v1961 = vunpack.c.l.b16 %v1840
        %v1962 = vpack.c.b16 %v1961, %v1961
        %1963 = vrot.lane.b32.xlu0 %v1962, 64
        %v1964 = vpop.permute.xlu0 %1963
        %v1966 = vunpack.c.l.b16 %v1874
        %v1967 = vpack.c.b16 %v1966, %v1966
        %1968 = vrot.lane.b32.xlu0 %v1967, 80
        %v1969 = vpop.permute.xlu0 %1968
        %v1971 = vunpack.c.l.b16 %v1842
        %v1972 = vpack.c.b16 %v1971, %v1971
        %1973 = vrot.lane.b32.xlu0 %v1972, 96
        %v1974 = vpop.permute.xlu0 %1973
        %v1976 = vunpack.c.l.b16 %v1876
        %v1977 = vpack.c.b16 %v1976, %v1976
        %1978 = vrot.lane.b32.xlu0 %v1977, 112
        %v1979 = vpop.permute.xlu0 %1978
        %v1981 = vunpack.c.l.b16 %v1935
        %v1982 = vpack.c.b16 %v1981, %v1981
        %1983 = vrot.lane.b32.xlu0 %v1982, 16
        %v1984 = vpop.permute.xlu0 %1983
        %v1986 = vunpack.c.l.b16 %v1909
        %v1987 = vpack.c.b16 %v1986, %v1986
        %1988 = vrot.lane.b32.xlu0 %v1987, 32
        %v1989 = vpop.permute.xlu0 %1988
        %v1991 = vunpack.c.l.b16 %v1943
        %v1992 = vpack.c.b16 %v1991, %v1991
        %1993 = vrot.lane.b32.xlu0 %v1992, 48
        %v1994 = vpop.permute.xlu0 %1993
        %v1996 = vunpack.c.l.b16 %v1908
        %v1997 = vpack.c.b16 %v1996, %v1996
        %1998 = vrot.lane.b32.xlu0 %v1997, 64
        %v1999 = vpop.permute.xlu0 %1998
        %v2001 = vunpack.c.l.b16 %v1942
        %v2002 = vpack.c.b16 %v2001, %v2001
        %2003 = vrot.lane.b32.xlu0 %v2002, 80
        %v2004 = vpop.permute.xlu0 %2003
        %v2006 = vunpack.c.l.b16 %v1910
        %v2007 = vpack.c.b16 %v2006, %v2006
        %2008 = vrot.lane.b32.xlu0 %v2007, 96
        %v2009 = vpop.permute.xlu0 %2008
        %v2011 = vunpack.c.l.b16 %v1944
        %v2012 = vpack.c.b16 %v2011, %v2011
        %2013 = vrot.lane.b32.xlu0 %v2012, 112
        %v2014 = vpop.permute.xlu0 %2013
        %v2017 = vsel %vm641, %v1833, %v1949
        %v2019 = vsel %vm645, %v2017, %v1954
        %v2021 = vsel %vm648, %v2019, %v1959
        %v2023 = vsel %vm651, %v2021, %v1964
        %v2025 = vsel %vm654, %v2023, %v1969
        %v2027 = vsel %vm657, %v2025, %v1974
        %v2029 = vsel %vm660, %v2027, %v1979
        %v2032 = vsel %vm641, %v1901, %v1984
        %v2034 = vsel %vm645, %v2032, %v1989
        %v2036 = vsel %vm648, %v2034, %v1994
        %v2038 = vsel %vm651, %v2036, %v1999
        %v2040 = vsel %vm654, %v2038, %v2004
        %v2042 = vsel %vm657, %v2040, %v2009
        %v2044 = vsel %vm660, %v2042, %v2014
        %v2047 = vunpack.c.l.b16 %v2029
        %v2048 = vunpack.c.l.b16 %v2044
        %v2049 = vpack.c.b16 %v2048, %v2047
        %2051 = vst [vmem:[#allocation3 + $0x20] sm:$0x33] %v2049
        %v2052 = vld [vmem:[#allocation2] sm:$0xf]
        %v2053 = vld [vmem:[#allocation2 + $0x4] sm:$0xf]
        %v2054 = vld [vmem:[#allocation2 + $0x8] sm:$0x1]
        %v2055 = vld [vmem:[#allocation2 + $0xc] sm:$0xf]
        %v2056 = vld [vmem:[#allocation2 + $0x10] sm:$0xf]
        %v2057 = vld [vmem:[#allocation2 + $0x14] sm:$0x1]
        %v2058 = vld [vmem:[#allocation2 + $0x18] sm:$0xf]
        %v2059 = vld [vmem:[#allocation2 + $0x1c] sm:$0xf]
        %v2060 = vld [vmem:[#allocation2 + $0x20] sm:$0x1]
        %v2061 = vld [vmem:[#allocation2 + $0x24] sm:$0xf]
        %v2062 = vld [vmem:[#allocation2 + $0x28] sm:$0xf]
        %v2063 = vld [vmem:[#allocation2 + $0x2c] sm:$0x1]
        %v2065 = vshrl.u32 %v2052, 16
        %v2067 = vrot.slane %v2065, 4
        %v2068 = vshll.u32 %v2052, 16
        %v2070 = vrot.slane %v2068, 5
        %v2071 = vor.u32 %v2067, %v2070
        %v2072 = vrot.slane %v2071, 4
        %v2074 = vshll.u32 %v2053, 16
        %v2076 = vrot.slane %v2074, 5
        %v2077 = vsel %vm1297, %v2072, %v2076
        %v2078 = vshrl.u32 %v2053, 16
        %v2080 = vrot.slane %v2078, 4
        %v2081 = vor.u32 %v2080, %v2076
        %v2082 = vrot.slane %v2081, 4
        %v2084 = vshll.u32 %v2054, 16
        %v2086 = vrot.slane %v2084, 5
        %v2087 = vsel %vm1297, %v2082, %v2086
        %v2089 = vshrl.u32 %v2055, 16
        %v2091 = vrot.slane %v2089, 4
        %v2092 = vshll.u32 %v2055, 16
        %v2094 = vrot.slane %v2092, 5
        %v2095 = vor.u32 %v2091, %v2094
        %v2096 = vrot.slane %v2095, 4
        %v2098 = vshll.u32 %v2056, 16
        %v2100 = vrot.slane %v2098, 5
        %v2101 = vsel %vm1297, %v2096, %v2100
        %v2102 = vshrl.u32 %v2056, 16
        %v2104 = vrot.slane %v2102, 4
        %v2105 = vor.u32 %v2104, %v2100
        %v2106 = vrot.slane %v2105, 4
        %v2108 = vshll.u32 %v2057, 16
        %v2110 = vrot.slane %v2108, 5
        %v2111 = vsel %vm1297, %v2106, %v2110
        %v2113 = vshrl.u32 %v2058, 16
        %v2115 = vrot.slane %v2113, 4
        %v2116 = vshll.u32 %v2058, 16
        %v2118 = vrot.slane %v2116, 5
        %v2119 = vor.u32 %v2115, %v2118
        %v2120 = vrot.slane %v2119, 4
        %v2122 = vshll.u32 %v2059, 16
        %v2124 = vrot.slane %v2122, 5
        %v2125 = vsel %vm1297, %v2120, %v2124
        %v2126 = vshrl.u32 %v2059, 16
        %v2128 = vrot.slane %v2126, 4
        %v2129 = vor.u32 %v2128, %v2124
        %v2130 = vrot.slane %v2129, 4
        %v2132 = vshll.u32 %v2060, 16
        %v2134 = vrot.slane %v2132, 5
        %v2135 = vsel %vm1297, %v2130, %v2134
        %v2137 = vshrl.u32 %v2061, 16
        %v2139 = vrot.slane %v2137, 4
        %v2140 = vshll.u32 %v2061, 16
        %v2142 = vrot.slane %v2140, 5
        %v2143 = vor.u32 %v2139, %v2142
        %v2144 = vrot.slane %v2143, 4
        %v2146 = vshll.u32 %v2062, 16
        %v2148 = vrot.slane %v2146, 5
        %v2149 = vsel %vm1297, %v2144, %v2148
        %v2150 = vshrl.u32 %v2062, 16
        %v2152 = vrot.slane %v2150, 4
        %v2153 = vor.u32 %v2152, %v2148
        %v2154 = vrot.slane %v2153, 4
        %v2156 = vshll.u32 %v2063, 16
        %v2158 = vrot.slane %v2156, 5
        %v2159 = vsel %vm1297, %v2154, %v2158
        %2160 = vrot.lane.b32.xlu0 %v2077, 126
        %v2161 = vpop.permute.xlu0 %2160
        %2162 = vrot.lane.b32.xlu0 %v2087, 126
        %v2163 = vpop.permute.xlu0 %2162
        %2164 = vrot.lane.b32.xlu0 %v2101, 126
        %v2165 = vpop.permute.xlu0 %2164
        %2166 = vrot.lane.b32.xlu0 %v2111, 126
        %v2167 = vpop.permute.xlu0 %2166
        %2168 = vrot.lane.b32.xlu0 %v2125, 126
        %v2169 = vpop.permute.xlu0 %2168
        %2170 = vrot.lane.b32.xlu0 %v2135, 126
        %v2171 = vpop.permute.xlu0 %2170
        %2172 = vrot.lane.b32.xlu0 %v2149, 126
        %v2173 = vpop.permute.xlu0 %2172
        %2174 = vrot.lane.b32.xlu0 %v2159, 126
        %v2175 = vpop.permute.xlu0 %2174
        %v2178 = vpack.i.b16 %v2165, %v2161
        %v2179 = vshrl.u32 %v2161, 16
        %v2180 = vshrl.u32 %v2165, 16
        %v2181 = vpack.i.b16 %v2180, %v2179
        %v2184 = vpack.i.b16 %v2173, %v2169
        %v2185 = vshrl.u32 %v2169, 16
        %v2186 = vshrl.u32 %v2173, 16
        %v2187 = vpack.i.b16 %v2186, %v2185
        %v2190 = vpack.i.b16 %v2167, %v2163
        %v2191 = vshrl.u32 %v2163, 16
        %v2192 = vshrl.u32 %v2167, 16
        %v2193 = vpack.i.b16 %v2192, %v2191
        %v2196 = vpack.i.b16 %v2175, %v2171
        %v2197 = vshrl.u32 %v2171, 16
        %v2198 = vshrl.u32 %v2175, 16
        %v2199 = vpack.i.b16 %v2198, %v2197
        %v2202 = vunpack.c.l.s4 1983009808
        %v2203 = vunpack.c.0.s8 %v2202
        %v2204 = vlaneseq
        %v2205 = vshrl.u32 %v2204, 7
        %v2206 = vsub.s32 %v2203, %v2205
        %v2207 = vrot.slane %v2178, %v2206
        %v2210 = vunpack.c.l.s4 1983009808
        %v2211 = vunpack.c.0.s8 %v2210
        %v2212 = vlaneseq
        %v2213 = vshrl.u32 %v2212, 7
        %v2214 = vsub.s32 %v2211, %v2213
        %v2215 = vrot.slane %v2184, %v2214
        %v2216 = vcombine.low %v2207, %v2215
        %v2217 = vcombine.high %v2207, %v2215
        %v2219 = vunpack.c.l.s4 1934713408
        %v2220 = vunpack.c.0.s8 %v2219
        %v2221 = vlaneseq
        %v2222 = vshrl.u32 %v2221, 7
        %v2223 = vsub.s32 %v2220, %v2222
        %v2224 = vrot.slane %v2216, %v2223
        %v2226 = vunpack.c.l.s4 1934713408
        %v2227 = vunpack.c.0.s8 %v2226
        %v2228 = vlaneseq
        %v2229 = vshrl.u32 %v2228, 7
        %v2230 = vsub.s32 %v2227, %v2229
        %v2231 = vrot.slane %v2217, %v2230
        %v2232 = vcombine.high %v2224, 0
        %v2233 = vcombine.high %v2231, 0
        %v2236 = vunpack.c.l.s4 1983009808
        %v2237 = vunpack.c.0.s8 %v2236
        %v2238 = vlaneseq
        %v2239 = vshrl.u32 %v2238, 7
        %v2240 = vsub.s32 %v2237, %v2239
        %v2241 = vrot.slane %v2181, %v2240
        %v2244 = vunpack.c.l.s4 1983009808
        %v2245 = vunpack.c.0.s8 %v2244
        %v2246 = vlaneseq
        %v2247 = vshrl.u32 %v2246, 7
        %v2248 = vsub.s32 %v2245, %v2247
        %v2249 = vrot.slane %v2187, %v2248
        %v2250 = vcombine.low %v2241, %v2249
        %v2251 = vcombine.high %v2241, %v2249
        %v2253 = vunpack.c.l.s4 1934713408
        %v2254 = vunpack.c.0.s8 %v2253
        %v2255 = vlaneseq
        %v2256 = vshrl.u32 %v2255, 7
        %v2257 = vsub.s32 %v2254, %v2256
        %v2258 = vrot.slane %v2250, %v2257
        %v2260 = vunpack.c.l.s4 1934713408
        %v2261 = vunpack.c.0.s8 %v2260
        %v2262 = vlaneseq
        %v2263 = vshrl.u32 %v2262, 7
        %v2264 = vsub.s32 %v2261, %v2263
        %v2265 = vrot.slane %v2251, %v2264
        %v2266 = vcombine.high %v2258, 0
        %v2267 = vcombine.high %v2265, 0
        %v2270 = vunpack.c.l.s4 1983009808
        %v2271 = vunpack.c.0.s8 %v2270
        %v2272 = vlaneseq
        %v2273 = vshrl.u32 %v2272, 7
        %v2274 = vsub.s32 %v2271, %v2273
        %v2275 = vrot.slane %v2190, %v2274
        %v2278 = vunpack.c.l.s4 1983009808
        %v2279 = vunpack.c.0.s8 %v2278
        %v2280 = vlaneseq
        %v2281 = vshrl.u32 %v2280, 7
        %v2282 = vsub.s32 %v2279, %v2281
        %v2283 = vrot.slane %v2196, %v2282
        %v2284 = vcombine.low %v2275, %v2283
        %v2285 = vcombine.high %v2275, %v2283
        %v2287 = vunpack.c.l.s4 1934713408
        %v2288 = vunpack.c.0.s8 %v2287
        %v2289 = vlaneseq
        %v2290 = vshrl.u32 %v2289, 7
        %v2291 = vsub.s32 %v2288, %v2290
        %v2292 = vrot.slane %v2284, %v2291
        %v2294 = vunpack.c.l.s4 1934713408
        %v2295 = vunpack.c.0.s8 %v2294
        %v2296 = vlaneseq
        %v2297 = vshrl.u32 %v2296, 7
        %v2298 = vsub.s32 %v2295, %v2297
        %v2299 = vrot.slane %v2285, %v2298
        %v2300 = vcombine.high %v2292, 0
        %v2301 = vcombine.high %v2299, 0
        %v2304 = vunpack.c.l.s4 1983009808
        %v2305 = vunpack.c.0.s8 %v2304
        %v2306 = vlaneseq
        %v2307 = vshrl.u32 %v2306, 7
        %v2308 = vsub.s32 %v2305, %v2307
        %v2309 = vrot.slane %v2193, %v2308
        %v2312 = vunpack.c.l.s4 1983009808
        %v2313 = vunpack.c.0.s8 %v2312
        %v2314 = vlaneseq
        %v2315 = vshrl.u32 %v2314, 7
        %v2316 = vsub.s32 %v2313, %v2315
        %v2317 = vrot.slane %v2199, %v2316
        %v2318 = vcombine.low %v2309, %v2317
        %v2319 = vcombine.high %v2309, %v2317
        %v2321 = vunpack.c.l.s4 1934713408
        %v2322 = vunpack.c.0.s8 %v2321
        %v2323 = vlaneseq
        %v2324 = vshrl.u32 %v2323, 7
        %v2325 = vsub.s32 %v2322, %v2324
        %v2326 = vrot.slane %v2318, %v2325
        %v2328 = vunpack.c.l.s4 1934713408
        %v2329 = vunpack.c.0.s8 %v2328
        %v2330 = vlaneseq
        %v2331 = vshrl.u32 %v2330, 7
        %v2332 = vsub.s32 %v2329, %v2331
        %v2333 = vrot.slane %v2319, %v2332
        %v2334 = vcombine.high %v2326, 0
        %v2335 = vcombine.high %v2333, 0
        %v2337 = vunpack.c.l.b16 %v2258
        %v2338 = vpack.c.b16 %v2337, %v2337
        %2339 = vrot.lane.b32.xlu0 %v2338, 16
        %v2340 = vpop.permute.xlu0 %2339
        %v2342 = vunpack.c.l.b16 %v2232
        %v2343 = vpack.c.b16 %v2342, %v2342
        %2344 = vrot.lane.b32.xlu0 %v2343, 32
        %v2345 = vpop.permute.xlu0 %2344
        %v2347 = vunpack.c.l.b16 %v2266
        %v2348 = vpack.c.b16 %v2347, %v2347
        %2349 = vrot.lane.b32.xlu0 %v2348, 48
        %v2350 = vpop.permute.xlu0 %2349
        %v2352 = vunpack.c.l.b16 %v2231
        %v2353 = vpack.c.b16 %v2352, %v2352
        %2354 = vrot.lane.b32.xlu0 %v2353, 64
        %v2355 = vpop.permute.xlu0 %2354
        %v2357 = vunpack.c.l.b16 %v2265
        %v2358 = vpack.c.b16 %v2357, %v2357
        %2359 = vrot.lane.b32.xlu0 %v2358, 80
        %v2360 = vpop.permute.xlu0 %2359
        %v2362 = vunpack.c.l.b16 %v2233
        %v2363 = vpack.c.b16 %v2362, %v2362
        %2364 = vrot.lane.b32.xlu0 %v2363, 96
        %v2365 = vpop.permute.xlu0 %2364
        %v2367 = vunpack.c.l.b16 %v2267
        %v2368 = vpack.c.b16 %v2367, %v2367
        %2369 = vrot.lane.b32.xlu0 %v2368, 112
        %v2370 = vpop.permute.xlu0 %2369
        %v2372 = vunpack.c.l.b16 %v2326
        %v2373 = vpack.c.b16 %v2372, %v2372
        %2374 = vrot.lane.b32.xlu0 %v2373, 16
        %v2375 = vpop.permute.xlu0 %2374
        %v2377 = vunpack.c.l.b16 %v2300
        %v2378 = vpack.c.b16 %v2377, %v2377
        %2379 = vrot.lane.b32.xlu0 %v2378, 32
        %v2380 = vpop.permute.xlu0 %2379
        %v2382 = vunpack.c.l.b16 %v2334
        %v2383 = vpack.c.b16 %v2382, %v2382
        %2384 = vrot.lane.b32.xlu0 %v2383, 48
        %v2385 = vpop.permute.xlu0 %2384
        %v2387 = vunpack.c.l.b16 %v2299
        %v2388 = vpack.c.b16 %v2387, %v2387
        %2389 = vrot.lane.b32.xlu0 %v2388, 64
        %v2390 = vpop.permute.xlu0 %2389
        %v2392 = vunpack.c.l.b16 %v2333
        %v2393 = vpack.c.b16 %v2392, %v2392
        %2394 = vrot.lane.b32.xlu0 %v2393, 80
        %v2395 = vpop.permute.xlu0 %2394
        %v2397 = vunpack.c.l.b16 %v2301
        %v2398 = vpack.c.b16 %v2397, %v2397
        %2399 = vrot.lane.b32.xlu0 %v2398, 96
        %v2400 = vpop.permute.xlu0 %2399
        %v2402 = vunpack.c.l.b16 %v2335
        %v2403 = vpack.c.b16 %v2402, %v2402
        %2404 = vrot.lane.b32.xlu0 %v2403, 112
        %v2405 = vpop.permute.xlu0 %2404
        %v2408 = vsel %vm641, %v2224, %v2340
        %v2410 = vsel %vm645, %v2408, %v2345
        %v2412 = vsel %vm648, %v2410, %v2350
        %v2414 = vsel %vm651, %v2412, %v2355
        %v2416 = vsel %vm654, %v2414, %v2360
        %v2418 = vsel %vm657, %v2416, %v2365
        %v2420 = vsel %vm660, %v2418, %v2370
        %v2423 = vsel %vm641, %v2292, %v2375
        %v2425 = vsel %vm645, %v2423, %v2380
        %v2427 = vsel %vm648, %v2425, %v2385
        %v2429 = vsel %vm651, %v2427, %v2390
        %v2431 = vsel %vm654, %v2429, %v2395
        %v2433 = vsel %vm657, %v2431, %v2400
        %v2435 = vsel %vm660, %v2433, %v2405
        %v2438 = vunpack.c.l.b16 %v2420
        %v2439 = vunpack.c.l.b16 %v2435
        %v2440 = vpack.c.b16 %v2439, %v2438
        %2442 = vst [vmem:[#allocation3 + $0x28] sm:$0x33] %v2440
        %v2443 = vld [vmem:[#allocation2] sm:$0xe]
        %v2444 = vld [vmem:[#allocation2 + $0x4] sm:$0xf]
        %v2445 = vld [vmem:[#allocation2 + $0x8] sm:$0x1]
        %v2446 = vld [vmem:[#allocation2 + $0xc] sm:$0xe]
        %v2447 = vld [vmem:[#allocation2 + $0x10] sm:$0xf]
        %v2448 = vld [vmem:[#allocation2 + $0x14] sm:$0x1]
        %v2449 = vld [vmem:[#allocation2 + $0x18] sm:$0xe]
        %v2450 = vld [vmem:[#allocation2 + $0x1c] sm:$0xf]
        %v2451 = vld [vmem:[#allocation2 + $0x20] sm:$0x1]
        %v2452 = vld [vmem:[#allocation2 + $0x24] sm:$0xe]
        %v2453 = vld [vmem:[#allocation2 + $0x28] sm:$0xf]
        %v2454 = vld [vmem:[#allocation2 + $0x2c] sm:$0x1]
        %vm2467 = vcmask 1042432
        %vm2468 = vcmask 1046532
        %vm2469 = vmor %vm2467, %vm2468
        %v2470 = vrot.slane %v2443, 5
        %v2471 = vrot.slane %v2470, 4
        %v2472 = vrot.slane %v2444, 5
        %v2473 = vsel %vm2469, %v2471, %v2472
        %v2474 = vrot.slane %v2472, 4
        %v2475 = vrot.slane %v2445, 5
        %v2476 = vsel %vm2469, %v2474, %v2475
        %v2477 = vrot.slane %v2446, 5
        %v2478 = vrot.slane %v2477, 4
        %v2479 = vrot.slane %v2447, 5
        %v2480 = vsel %vm2469, %v2478, %v2479
        %v2481 = vrot.slane %v2479, 4
        %v2482 = vrot.slane %v2448, 5
        %v2483 = vsel %vm2469, %v2481, %v2482
        %v2484 = vrot.slane %v2449, 5
        %v2485 = vrot.slane %v2484, 4
        %v2486 = vrot.slane %v2450, 5
        %v2487 = vsel %vm2469, %v2485, %v2486
        %v2488 = vrot.slane %v2486, 4
        %v2489 = vrot.slane %v2451, 5
        %v2490 = vsel %vm2469, %v2488, %v2489
        %v2491 = vrot.slane %v2452, 5
        %v2492 = vrot.slane %v2491, 4
        %v2493 = vrot.slane %v2453, 5
        %v2494 = vsel %vm2469, %v2492, %v2493
        %v2495 = vrot.slane %v2493, 4
        %v2496 = vrot.slane %v2454, 5
        %v2497 = vsel %vm2469, %v2495, %v2496
        %v2500 = vpack.i.b16 %v2480, %v2473
        %v2501 = vshrl.u32 %v2473, 16
        %v2502 = vshrl.u32 %v2480, 16
        %v2503 = vpack.i.b16 %v2502, %v2501
        %v2506 = vpack.i.b16 %v2494, %v2487
        %v2507 = vshrl.u32 %v2487, 16
        %v2508 = vshrl.u32 %v2494, 16
        %v2509 = vpack.i.b16 %v2508, %v2507
        %v2512 = vpack.i.b16 %v2483, %v2476
        %v2513 = vshrl.u32 %v2476, 16
        %v2514 = vshrl.u32 %v2483, 16
        %v2515 = vpack.i.b16 %v2514, %v2513
        %v2518 = vpack.i.b16 %v2497, %v2490
        %v2519 = vshrl.u32 %v2490, 16
        %v2520 = vshrl.u32 %v2497, 16
        %v2521 = vpack.i.b16 %v2520, %v2519
        %v2524 = vunpack.c.l.s4 1983009808
        %v2525 = vunpack.c.0.s8 %v2524
        %v2526 = vlaneseq
        %v2527 = vshrl.u32 %v2526, 7
        %v2528 = vsub.s32 %v2525, %v2527
        %v2529 = vrot.slane %v2500, %v2528
        %v2532 = vunpack.c.l.s4 1983009808
        %v2533 = vunpack.c.0.s8 %v2532
        %v2534 = vlaneseq
        %v2535 = vshrl.u32 %v2534, 7
        %v2536 = vsub.s32 %v2533, %v2535
        %v2537 = vrot.slane %v2506, %v2536
        %v2538 = vcombine.low %v2529, %v2537
        %v2539 = vcombine.high %v2529, %v2537
        %v2541 = vunpack.c.l.s4 1934713408
        %v2542 = vunpack.c.0.s8 %v2541
        %v2543 = vlaneseq
        %v2544 = vshrl.u32 %v2543, 7
        %v2545 = vsub.s32 %v2542, %v2544
        %v2546 = vrot.slane %v2538, %v2545
        %v2548 = vunpack.c.l.s4 1934713408
        %v2549 = vunpack.c.0.s8 %v2548
        %v2550 = vlaneseq
        %v2551 = vshrl.u32 %v2550, 7
        %v2552 = vsub.s32 %v2549, %v2551
        %v2553 = vrot.slane %v2539, %v2552
        %v2554 = vcombine.high %v2546, 0
        %v2555 = vcombine.high %v2553, 0
        %v2558 = vunpack.c.l.s4 1983009808
        %v2559 = vunpack.c.0.s8 %v2558
        %v2560 = vlaneseq
        %v2561 = vshrl.u32 %v2560, 7
        %v2562 = vsub.s32 %v2559, %v2561
        %v2563 = vrot.slane %v2503, %v2562
        %v2566 = vunpack.c.l.s4 1983009808
        %v2567 = vunpack.c.0.s8 %v2566
        %v2568 = vlaneseq
        %v2569 = vshrl.u32 %v2568, 7
        %v2570 = vsub.s32 %v2567, %v2569
        %v2571 = vrot.slane %v2509, %v2570
        %v2572 = vcombine.low %v2563, %v2571
        %v2573 = vcombine.high %v2563, %v2571
        %v2575 = vunpack.c.l.s4 1934713408
        %v2576 = vunpack.c.0.s8 %v2575
        %v2577 = vlaneseq
        %v2578 = vshrl.u32 %v2577, 7
        %v2579 = vsub.s32 %v2576, %v2578
        %v2580 = vrot.slane %v2572, %v2579
        %v2582 = vunpack.c.l.s4 1934713408
        %v2583 = vunpack.c.0.s8 %v2582
        %v2584 = vlaneseq
        %v2585 = vshrl.u32 %v2584, 7
        %v2586 = vsub.s32 %v2583, %v2585
        %v2587 = vrot.slane %v2573, %v2586
        %v2588 = vcombine.high %v2580, 0
        %v2589 = vcombine.high %v2587, 0
        %v2592 = vunpack.c.l.s4 1983009808
        %v2593 = vunpack.c.0.s8 %v2592
        %v2594 = vlaneseq
        %v2595 = vshrl.u32 %v2594, 7
        %v2596 = vsub.s32 %v2593, %v2595
        %v2597 = vrot.slane %v2512, %v2596
        %v2600 = vunpack.c.l.s4 1983009808
        %v2601 = vunpack.c.0.s8 %v2600
        %v2602 = vlaneseq
        %v2603 = vshrl.u32 %v2602, 7
        %v2604 = vsub.s32 %v2601, %v2603
        %v2605 = vrot.slane %v2518, %v2604
        %v2606 = vcombine.low %v2597, %v2605
        %v2607 = vcombine.high %v2597, %v2605
        %v2609 = vunpack.c.l.s4 1934713408
        %v2610 = vunpack.c.0.s8 %v2609
        %v2611 = vlaneseq
        %v2612 = vshrl.u32 %v2611, 7
        %v2613 = vsub.s32 %v2610, %v2612
        %v2614 = vrot.slane %v2606, %v2613
        %v2616 = vunpack.c.l.s4 1934713408
        %v2617 = vunpack.c.0.s8 %v2616
        %v2618 = vlaneseq
        %v2619 = vshrl.u32 %v2618, 7
        %v2620 = vsub.s32 %v2617, %v2619
        %v2621 = vrot.slane %v2607, %v2620
        %v2622 = vcombine.high %v2614, 0
        %v2623 = vcombine.high %v2621, 0
        %v2626 = vunpack.c.l.s4 1983009808
        %v2627 = vunpack.c.0.s8 %v2626
        %v2628 = vlaneseq
        %v2629 = vshrl.u32 %v2628, 7
        %v2630 = vsub.s32 %v2627, %v2629
        %v2631 = vrot.slane %v2515, %v2630
        %v2634 = vunpack.c.l.s4 1983009808
        %v2635 = vunpack.c.0.s8 %v2634
        %v2636 = vlaneseq
        %v2637 = vshrl.u32 %v2636, 7
        %v2638 = vsub.s32 %v2635, %v2637
        %v2639 = vrot.slane %v2521, %v2638
        %v2640 = vcombine.low %v2631, %v2639
        %v2641 = vcombine.high %v2631, %v2639
        %v2643 = vunpack.c.l.s4 1934713408
        %v2644 = vunpack.c.0.s8 %v2643
        %v2645 = vlaneseq
        %v2646 = vshrl.u32 %v2645, 7
        %v2647 = vsub.s32 %v2644, %v2646
        %v2648 = vrot.slane %v2640, %v2647
        %v2650 = vunpack.c.l.s4 1934713408
        %v2651 = vunpack.c.0.s8 %v2650
        %v2652 = vlaneseq
        %v2653 = vshrl.u32 %v2652, 7
        %v2654 = vsub.s32 %v2651, %v2653
        %v2655 = vrot.slane %v2641, %v2654
        %v2656 = vcombine.high %v2648, 0
        %v2657 = vcombine.high %v2655, 0
        %v2659 = vunpack.c.l.b16 %v2580
        %v2660 = vpack.c.b16 %v2659, %v2659
        %2661 = vrot.lane.b32.xlu0 %v2660, 16
        %v2662 = vpop.permute.xlu0 %2661
        %v2664 = vunpack.c.l.b16 %v2554
        %v2665 = vpack.c.b16 %v2664, %v2664
        %2666 = vrot.lane.b32.xlu0 %v2665, 32
        %v2667 = vpop.permute.xlu0 %2666
        %v2669 = vunpack.c.l.b16 %v2588
        %v2670 = vpack.c.b16 %v2669, %v2669
        %2671 = vrot.lane.b32.xlu0 %v2670, 48
        %v2672 = vpop.permute.xlu0 %2671
        %v2674 = vunpack.c.l.b16 %v2553
        %v2675 = vpack.c.b16 %v2674, %v2674
        %2676 = vrot.lane.b32.xlu0 %v2675, 64
        %v2677 = vpop.permute.xlu0 %2676
        %v2679 = vunpack.c.l.b16 %v2587
        %v2680 = vpack.c.b16 %v2679, %v2679
        %2681 = vrot.lane.b32.xlu0 %v2680, 80
        %v2682 = vpop.permute.xlu0 %2681
        %v2684 = vunpack.c.l.b16 %v2555
        %v2685 = vpack.c.b16 %v2684, %v2684
        %2686 = vrot.lane.b32.xlu0 %v2685, 96
        %v2687 = vpop.permute.xlu0 %2686
        %v2689 = vunpack.c.l.b16 %v2589
        %v2690 = vpack.c.b16 %v2689, %v2689
        %2691 = vrot.lane.b32.xlu0 %v2690, 112
        %v2692 = vpop.permute.xlu0 %2691
        %v2694 = vunpack.c.l.b16 %v2648
        %v2695 = vpack.c.b16 %v2694, %v2694
        %2696 = vrot.lane.b32.xlu0 %v2695, 16
        %v2697 = vpop.permute.xlu0 %2696
        %v2699 = vunpack.c.l.b16 %v2622
        %v2700 = vpack.c.b16 %v2699, %v2699
        %2701 = vrot.lane.b32.xlu0 %v2700, 32
        %v2702 = vpop.permute.xlu0 %2701
        %v2704 = vunpack.c.l.b16 %v2656
        %v2705 = vpack.c.b16 %v2704, %v2704
        %2706 = vrot.lane.b32.xlu0 %v2705, 48
        %v2707 = vpop.permute.xlu0 %2706
        %v2709 = vunpack.c.l.b16 %v2621
        %v2710 = vpack.c.b16 %v2709, %v2709
        %2711 = vrot.lane.b32.xlu0 %v2710, 64
        %v2712 = vpop.permute.xlu0 %2711
        %v2714 = vunpack.c.l.b16 %v2655
        %v2715 = vpack.c.b16 %v2714, %v2714
        %2716 = vrot.lane.b32.xlu0 %v2715, 80
        %v2717 = vpop.permute.xlu0 %2716
        %v2719 = vunpack.c.l.b16 %v2623
        %v2720 = vpack.c.b16 %v2719, %v2719
        %2721 = vrot.lane.b32.xlu0 %v2720, 96
        %v2722 = vpop.permute.xlu0 %2721
        %v2724 = vunpack.c.l.b16 %v2657
        %v2725 = vpack.c.b16 %v2724, %v2724
        %2726 = vrot.lane.b32.xlu0 %v2725, 112
        %v2727 = vpop.permute.xlu0 %2726
        %v2730 = vsel %vm641, %v2546, %v2662
        %v2732 = vsel %vm645, %v2730, %v2667
        %v2734 = vsel %vm648, %v2732, %v2672
        %v2736 = vsel %vm651, %v2734, %v2677
        %v2738 = vsel %vm654, %v2736, %v2682
        %v2740 = vsel %vm657, %v2738, %v2687
        %v2742 = vsel %vm660, %v2740, %v2692
        %v2745 = vsel %vm641, %v2614, %v2697
        %v2747 = vsel %vm645, %v2745, %v2702
        %v2749 = vsel %vm648, %v2747, %v2707
        %v2751 = vsel %vm651, %v2749, %v2712
        %v2753 = vsel %vm654, %v2751, %v2717
        %v2755 = vsel %vm657, %v2753, %v2722
        %v2757 = vsel %vm660, %v2755, %v2727
        %v2760 = vunpack.c.l.b16 %v2742
        %v2761 = vunpack.c.l.b16 %v2757
        %v2762 = vpack.c.b16 %v2761, %v2760
        %2764 = vst [vmem:[#allocation3 + $0x30] sm:$0x33] %v2762
        %v2765 = vld [vmem:[#allocation2] sm:$0xe]
        %v2766 = vld [vmem:[#allocation2 + $0x4] sm:$0xf]
        %v2767 = vld [vmem:[#allocation2 + $0x8] sm:$0x1]
        %v2768 = vld [vmem:[#allocation2 + $0xc] sm:$0xe]
        %v2769 = vld [vmem:[#allocation2 + $0x10] sm:$0xf]
        %v2770 = vld [vmem:[#allocation2 + $0x14] sm:$0x1]
        %v2771 = vld [vmem:[#allocation2 + $0x18] sm:$0xe]
        %v2772 = vld [vmem:[#allocation2 + $0x1c] sm:$0xf]
        %v2773 = vld [vmem:[#allocation2 + $0x20] sm:$0x1]
        %v2774 = vld [vmem:[#allocation2 + $0x24] sm:$0xe]
        %v2775 = vld [vmem:[#allocation2 + $0x28] sm:$0xf]
        %v2776 = vld [vmem:[#allocation2 + $0x2c] sm:$0x1]
        %v2789 = vrot.slane %v2765, 5
        %v2790 = vrot.slane %v2789, 4
        %v2791 = vrot.slane %v2766, 5
        %v2792 = vsel %vm2469, %v2790, %v2791
        %v2793 = vrot.slane %v2791, 4
        %v2794 = vrot.slane %v2767, 5
        %v2795 = vsel %vm2469, %v2793, %v2794
        %v2796 = vrot.slane %v2768, 5
        %v2797 = vrot.slane %v2796, 4
        %v2798 = vrot.slane %v2769, 5
        %v2799 = vsel %vm2469, %v2797, %v2798
        %v2800 = vrot.slane %v2798, 4
        %v2801 = vrot.slane %v2770, 5
        %v2802 = vsel %vm2469, %v2800, %v2801
        %v2803 = vrot.slane %v2771, 5
        %v2804 = vrot.slane %v2803, 4
        %v2805 = vrot.slane %v2772, 5
        %v2806 = vsel %vm2469, %v2804, %v2805
        %v2807 = vrot.slane %v2805, 4
        %v2808 = vrot.slane %v2773, 5
        %v2809 = vsel %vm2469, %v2807, %v2808
        %v2810 = vrot.slane %v2774, 5
        %v2811 = vrot.slane %v2810, 4
        %v2812 = vrot.slane %v2775, 5
        %v2813 = vsel %vm2469, %v2811, %v2812
        %v2814 = vrot.slane %v2812, 4
        %v2815 = vrot.slane %v2776, 5
        %v2816 = vsel %vm2469, %v2814, %v2815
        %2817 = vrot.lane.b32.xlu0 %v2792, 127
        %v2818 = vpop.permute.xlu0 %2817
        %2819 = vrot.lane.b32.xlu0 %v2795, 127
        %v2820 = vpop.permute.xlu0 %2819
        %2821 = vrot.lane.b32.xlu0 %v2799, 127
        %v2822 = vpop.permute.xlu0 %2821
        %2823 = vrot.lane.b32.xlu0 %v2802, 127
        %v2824 = vpop.permute.xlu0 %2823
        %2825 = vrot.lane.b32.xlu0 %v2806, 127
        %v2826 = vpop.permute.xlu0 %2825
        %2827 = vrot.lane.b32.xlu0 %v2809, 127
        %v2828 = vpop.permute.xlu0 %2827
        %2829 = vrot.lane.b32.xlu0 %v2813, 127
        %v2830 = vpop.permute.xlu0 %2829
        %2831 = vrot.lane.b32.xlu0 %v2816, 127
        %v2832 = vpop.permute.xlu0 %2831
        %v2835 = vpack.i.b16 %v2822, %v2818
        %v2836 = vshrl.u32 %v2818, 16
        %v2837 = vshrl.u32 %v2822, 16
        %v2838 = vpack.i.b16 %v2837, %v2836
        %v2841 = vpack.i.b16 %v2830, %v2826
        %v2842 = vshrl.u32 %v2826, 16
        %v2843 = vshrl.u32 %v2830, 16
        %v2844 = vpack.i.b16 %v2843, %v2842
        %v2847 = vpack.i.b16 %v2824, %v2820
        %v2848 = vshrl.u32 %v2820, 16
        %v2849 = vshrl.u32 %v2824, 16
        %v2850 = vpack.i.b16 %v2849, %v2848
        %v2853 = vpack.i.b16 %v2832, %v2828
        %v2854 = vshrl.u32 %v2828, 16
        %v2855 = vshrl.u32 %v2832, 16
        %v2856 = vpack.i.b16 %v2855, %v2854
        %v2859 = vunpack.c.l.s4 1983009808
        %v2860 = vunpack.c.0.s8 %v2859
        %v2861 = vlaneseq
        %v2862 = vshrl.u32 %v2861, 7
        %v2863 = vsub.s32 %v2860, %v2862
        %v2864 = vrot.slane %v2835, %v2863
        %v2867 = vunpack.c.l.s4 1983009808
        %v2868 = vunpack.c.0.s8 %v2867
        %v2869 = vlaneseq
        %v2870 = vshrl.u32 %v2869, 7
        %v2871 = vsub.s32 %v2868, %v2870
        %v2872 = vrot.slane %v2841, %v2871
        %v2873 = vcombine.low %v2864, %v2872
        %v2874 = vcombine.high %v2864, %v2872
        %v2876 = vunpack.c.l.s4 1934713408
        %v2877 = vunpack.c.0.s8 %v2876
        %v2878 = vlaneseq
        %v2879 = vshrl.u32 %v2878, 7
        %v2880 = vsub.s32 %v2877, %v2879
        %v2881 = vrot.slane %v2873, %v2880
        %v2883 = vunpack.c.l.s4 1934713408
        %v2884 = vunpack.c.0.s8 %v2883
        %v2885 = vlaneseq
        %v2886 = vshrl.u32 %v2885, 7
        %v2887 = vsub.s32 %v2884, %v2886
        %v2888 = vrot.slane %v2874, %v2887
        %v2889 = vcombine.high %v2881, 0
        %v2890 = vcombine.high %v2888, 0
        %v2893 = vunpack.c.l.s4 1983009808
        %v2894 = vunpack.c.0.s8 %v2893
        %v2895 = vlaneseq
        %v2896 = vshrl.u32 %v2895, 7
        %v2897 = vsub.s32 %v2894, %v2896
        %v2898 = vrot.slane %v2838, %v2897
        %v2901 = vunpack.c.l.s4 1983009808
        %v2902 = vunpack.c.0.s8 %v2901
        %v2903 = vlaneseq
        %v2904 = vshrl.u32 %v2903, 7
        %v2905 = vsub.s32 %v2902, %v2904
        %v2906 = vrot.slane %v2844, %v2905
        %v2907 = vcombine.low %v2898, %v2906
        %v2908 = vcombine.high %v2898, %v2906
        %v2910 = vunpack.c.l.s4 1934713408
        %v2911 = vunpack.c.0.s8 %v2910
        %v2912 = vlaneseq
        %v2913 = vshrl.u32 %v2912, 7
        %v2914 = vsub.s32 %v2911, %v2913
        %v2915 = vrot.slane %v2907, %v2914
        %v2917 = vunpack.c.l.s4 1934713408
        %v2918 = vunpack.c.0.s8 %v2917
        %v2919 = vlaneseq
        %v2920 = vshrl.u32 %v2919, 7
        %v2921 = vsub.s32 %v2918, %v2920
        %v2922 = vrot.slane %v2908, %v2921
        %v2923 = vcombine.high %v2915, 0
        %v2924 = vcombine.high %v2922, 0
        %v2927 = vunpack.c.l.s4 1983009808
        %v2928 = vunpack.c.0.s8 %v2927
        %v2929 = vlaneseq
        %v2930 = vshrl.u32 %v2929, 7
        %v2931 = vsub.s32 %v2928, %v2930
        %v2932 = vrot.slane %v2847, %v2931
        %v2935 = vunpack.c.l.s4 1983009808
        %v2936 = vunpack.c.0.s8 %v2935
        %v2937 = vlaneseq
        %v2938 = vshrl.u32 %v2937, 7
        %v2939 = vsub.s32 %v2936, %v2938
        %v2940 = vrot.slane %v2853, %v2939
        %v2941 = vcombine.low %v2932, %v2940
        %v2942 = vcombine.high %v2932, %v2940
        %v2944 = vunpack.c.l.s4 1934713408
        %v2945 = vunpack.c.0.s8 %v2944
        %v2946 = vlaneseq
        %v2947 = vshrl.u32 %v2946, 7
        %v2948 = vsub.s32 %v2945, %v2947
        %v2949 = vrot.slane %v2941, %v2948
        %v2951 = vunpack.c.l.s4 1934713408
        %v2952 = vunpack.c.0.s8 %v2951
        %v2953 = vlaneseq
        %v2954 = vshrl.u32 %v2953, 7
        %v2955 = vsub.s32 %v2952, %v2954
        %v2956 = vrot.slane %v2942, %v2955
        %v2957 = vcombine.high %v2949, 0
        %v2958 = vcombine.high %v2956, 0
        %v2961 = vunpack.c.l.s4 1983009808
        %v2962 = vunpack.c.0.s8 %v2961
        %v2963 = vlaneseq
        %v2964 = vshrl.u32 %v2963, 7
        %v2965 = vsub.s32 %v2962, %v2964
        %v2966 = vrot.slane %v2850, %v2965
        %v2969 = vunpack.c.l.s4 1983009808
        %v2970 = vunpack.c.0.s8 %v2969
        %v2971 = vlaneseq
        %v2972 = vshrl.u32 %v2971, 7
        %v2973 = vsub.s32 %v2970, %v2972
        %v2974 = vrot.slane %v2856, %v2973
        %v2975 = vcombine.low %v2966, %v2974
        %v2976 = vcombine.high %v2966, %v2974
        %v2978 = vunpack.c.l.s4 1934713408
        %v2979 = vunpack.c.0.s8 %v2978
        %v2980 = vlaneseq
        %v2981 = vshrl.u32 %v2980, 7
        %v2982 = vsub.s32 %v2979, %v2981
        %v2983 = vrot.slane %v2975, %v2982
        %v2985 = vunpack.c.l.s4 1934713408
        %v2986 = vunpack.c.0.s8 %v2985
        %v2987 = vlaneseq
        %v2988 = vshrl.u32 %v2987, 7
        %v2989 = vsub.s32 %v2986, %v2988
        %v2990 = vrot.slane %v2976, %v2989
        %v2991 = vcombine.high %v2983, 0
        %v2992 = vcombine.high %v2990, 0
        %v2994 = vunpack.c.l.b16 %v2915
        %v2995 = vpack.c.b16 %v2994, %v2994
        %2996 = vrot.lane.b32.xlu0 %v2995, 16
        %v2997 = vpop.permute.xlu0 %2996
        %v2999 = vunpack.c.l.b16 %v2889
        %v3000 = vpack.c.b16 %v2999, %v2999
        %3001 = vrot.lane.b32.xlu0 %v3000, 32
        %v3002 = vpop.permute.xlu0 %3001
        %v3004 = vunpack.c.l.b16 %v2923
        %v3005 = vpack.c.b16 %v3004, %v3004
        %3006 = vrot.lane.b32.xlu0 %v3005, 48
        %v3007 = vpop.permute.xlu0 %3006
        %v3009 = vunpack.c.l.b16 %v2888
        %v3010 = vpack.c.b16 %v3009, %v3009
        %3011 = vrot.lane.b32.xlu0 %v3010, 64
        %v3012 = vpop.permute.xlu0 %3011
        %v3014 = vunpack.c.l.b16 %v2922
        %v3015 = vpack.c.b16 %v3014, %v3014
        %3016 = vrot.lane.b32.xlu0 %v3015, 80
        %v3017 = vpop.permute.xlu0 %3016
        %v3019 = vunpack.c.l.b16 %v2890
        %v3020 = vpack.c.b16 %v3019, %v3019
        %3021 = vrot.lane.b32.xlu0 %v3020, 96
        %v3022 = vpop.permute.xlu0 %3021
        %v3024 = vunpack.c.l.b16 %v2924
        %v3025 = vpack.c.b16 %v3024, %v3024
        %3026 = vrot.lane.b32.xlu0 %v3025, 112
        %v3027 = vpop.permute.xlu0 %3026
        %v3029 = vunpack.c.l.b16 %v2983
        %v3030 = vpack.c.b16 %v3029, %v3029
        %3031 = vrot.lane.b32.xlu0 %v3030, 16
        %v3032 = vpop.permute.xlu0 %3031
        %v3034 = vunpack.c.l.b16 %v2957
        %v3035 = vpack.c.b16 %v3034, %v3034
        %3036 = vrot.lane.b32.xlu0 %v3035, 32
        %v3037 = vpop.permute.xlu0 %3036
        %v3039 = vunpack.c.l.b16 %v2991
        %v3040 = vpack.c.b16 %v3039, %v3039
        %3041 = vrot.lane.b32.xlu0 %v3040, 48
        %v3042 = vpop.permute.xlu0 %3041
        %v3044 = vunpack.c.l.b16 %v2956
        %v3045 = vpack.c.b16 %v3044, %v3044
        %3046 = vrot.lane.b32.xlu0 %v3045, 64
        %v3047 = vpop.permute.xlu0 %3046
        %v3049 = vunpack.c.l.b16 %v2990
        %v3050 = vpack.c.b16 %v3049, %v3049
        %3051 = vrot.lane.b32.xlu0 %v3050, 80
        %v3052 = vpop.permute.xlu0 %3051
        %v3054 = vunpack.c.l.b16 %v2958
        %v3055 = vpack.c.b16 %v3054, %v3054
        %3056 = vrot.lane.b32.xlu0 %v3055, 96
        %v3057 = vpop.permute.xlu0 %3056
        %v3059 = vunpack.c.l.b16 %v2992
        %v3060 = vpack.c.b16 %v3059, %v3059
        %3061 = vrot.lane.b32.xlu0 %v3060, 112
        %v3062 = vpop.permute.xlu0 %3061
        %v3065 = vsel %vm641, %v2881, %v2997
        %v3067 = vsel %vm645, %v3065, %v3002
        %v3069 = vsel %vm648, %v3067, %v3007
        %v3071 = vsel %vm651, %v3069, %v3012
        %v3073 = vsel %vm654, %v3071, %v3017
        %v3075 = vsel %vm657, %v3073, %v3022
        %v3077 = vsel %vm660, %v3075, %v3027
        %v3080 = vsel %vm641, %v2949, %v3032
        %v3082 = vsel %vm645, %v3080, %v3037
        %v3084 = vsel %vm648, %v3082, %v3042
        %v3086 = vsel %vm651, %v3084, %v3047
        %v3088 = vsel %vm654, %v3086, %v3052
        %v3090 = vsel %vm657, %v3088, %v3057
        %v3092 = vsel %vm660, %v3090, %v3062
        %v3095 = vunpack.c.l.b16 %v3077
        %v3096 = vunpack.c.l.b16 %v3092
        %v3097 = vpack.c.b16 %v3096, %v3095
        %3099 = vst [vmem:[#allocation3 + $0x38] sm:$0x33] %v3097
        %v3100 = vld [vmem:[#allocation2] sm:$0xe]
        %v3101 = vld [vmem:[#allocation2 + $0x4] sm:$0xf]
        %v3102 = vld [vmem:[#allocation2 + $0x8] sm:$0x1]
        %v3103 = vld [vmem:[#allocation2 + $0xc] sm:$0xe]
        %v3104 = vld [vmem:[#allocation2 + $0x10] sm:$0xf]
        %v3105 = vld [vmem:[#allocation2 + $0x14] sm:$0x1]
        %v3106 = vld [vmem:[#allocation2 + $0x18] sm:$0xe]
        %v3107 = vld [vmem:[#allocation2 + $0x1c] sm:$0xf]
        %v3108 = vld [vmem:[#allocation2 + $0x20] sm:$0x1]
        %v3109 = vld [vmem:[#allocation2 + $0x24] sm:$0xe]
        %v3110 = vld [vmem:[#allocation2 + $0x28] sm:$0xf]
        %v3111 = vld [vmem:[#allocation2 + $0x2c] sm:$0x1]
        %v3124 = vrot.slane %v3100, 5
        %v3125 = vrot.slane %v3124, 4
        %v3126 = vrot.slane %v3101, 5
        %v3127 = vsel %vm2469, %v3125, %v3126
        %v3128 = vrot.slane %v3126, 4
        %v3129 = vrot.slane %v3102, 5
        %v3130 = vsel %vm2469, %v3128, %v3129
        %v3131 = vrot.slane %v3103, 5
        %v3132 = vrot.slane %v3131, 4
        %v3133 = vrot.slane %v3104, 5
        %v3134 = vsel %vm2469, %v3132, %v3133
        %v3135 = vrot.slane %v3133, 4
        %v3136 = vrot.slane %v3105, 5
        %v3137 = vsel %vm2469, %v3135, %v3136
        %v3138 = vrot.slane %v3106, 5
        %v3139 = vrot.slane %v3138, 4
        %v3140 = vrot.slane %v3107, 5
        %v3141 = vsel %vm2469, %v3139, %v3140
        %v3142 = vrot.slane %v3140, 4
        %v3143 = vrot.slane %v3108, 5
        %v3144 = vsel %vm2469, %v3142, %v3143
        %v3145 = vrot.slane %v3109, 5
        %v3146 = vrot.slane %v3145, 4
        %v3147 = vrot.slane %v3110, 5
        %v3148 = vsel %vm2469, %v3146, %v3147
        %v3149 = vrot.slane %v3147, 4
        %v3150 = vrot.slane %v3111, 5
        %v3151 = vsel %vm2469, %v3149, %v3150
        %3152 = vrot.lane.b32.xlu0 %v3127, 126
        %v3153 = vpop.permute.xlu0 %3152
        %3154 = vrot.lane.b32.xlu0 %v3130, 126
        %v3155 = vpop.permute.xlu0 %3154
        %3156 = vrot.lane.b32.xlu0 %v3134, 126
        %v3157 = vpop.permute.xlu0 %3156
        %3158 = vrot.lane.b32.xlu0 %v3137, 126
        %v3159 = vpop.permute.xlu0 %3158
        %3160 = vrot.lane.b32.xlu0 %v3141, 126
        %v3161 = vpop.permute.xlu0 %3160
        %3162 = vrot.lane.b32.xlu0 %v3144, 126
        %v3163 = vpop.permute.xlu0 %3162
        %3164 = vrot.lane.b32.xlu0 %v3148, 126
        %v3165 = vpop.permute.xlu0 %3164
        %3166 = vrot.lane.b32.xlu0 %v3151, 126
        %v3167 = vpop.permute.xlu0 %3166
        %v3170 = vpack.i.b16 %v3157, %v3153
        %v3171 = vshrl.u32 %v3153, 16
        %v3172 = vshrl.u32 %v3157, 16
        %v3173 = vpack.i.b16 %v3172, %v3171
        %v3176 = vpack.i.b16 %v3165, %v3161
        %v3177 = vshrl.u32 %v3161, 16
        %v3178 = vshrl.u32 %v3165, 16
        %v3179 = vpack.i.b16 %v3178, %v3177
        %v3182 = vpack.i.b16 %v3159, %v3155
        %v3183 = vshrl.u32 %v3155, 16
        %v3184 = vshrl.u32 %v3159, 16
        %v3185 = vpack.i.b16 %v3184, %v3183
        %v3188 = vpack.i.b16 %v3167, %v3163
        %v3189 = vshrl.u32 %v3163, 16
        %v3190 = vshrl.u32 %v3167, 16
        %v3191 = vpack.i.b16 %v3190, %v3189
        %v3194 = vunpack.c.l.s4 1983009808
        %v3195 = vunpack.c.0.s8 %v3194
        %v3196 = vlaneseq
        %v3197 = vshrl.u32 %v3196, 7
        %v3198 = vsub.s32 %v3195, %v3197
        %v3199 = vrot.slane %v3170, %v3198
        %v3202 = vunpack.c.l.s4 1983009808
        %v3203 = vunpack.c.0.s8 %v3202
        %v3204 = vlaneseq
        %v3205 = vshrl.u32 %v3204, 7
        %v3206 = vsub.s32 %v3203, %v3205
        %v3207 = vrot.slane %v3176, %v3206
        %v3208 = vcombine.low %v3199, %v3207
        %v3209 = vcombine.high %v3199, %v3207
        %v3211 = vunpack.c.l.s4 1934713408
        %v3212 = vunpack.c.0.s8 %v3211
        %v3213 = vlaneseq
        %v3214 = vshrl.u32 %v3213, 7
        %v3215 = vsub.s32 %v3212, %v3214
        %v3216 = vrot.slane %v3208, %v3215
        %v3218 = vunpack.c.l.s4 1934713408
        %v3219 = vunpack.c.0.s8 %v3218
        %v3220 = vlaneseq
        %v3221 = vshrl.u32 %v3220, 7
        %v3222 = vsub.s32 %v3219, %v3221
        %v3223 = vrot.slane %v3209, %v3222
        %v3224 = vcombine.high %v3216, 0
        %v3225 = vcombine.high %v3223, 0
        %v3228 = vunpack.c.l.s4 1983009808
        %v3229 = vunpack.c.0.s8 %v3228
        %v3230 = vlaneseq
        %v3231 = vshrl.u32 %v3230, 7
        %v3232 = vsub.s32 %v3229, %v3231
        %v3233 = vrot.slane %v3173, %v3232
        %v3236 = vunpack.c.l.s4 1983009808
        %v3237 = vunpack.c.0.s8 %v3236
        %v3238 = vlaneseq
        %v3239 = vshrl.u32 %v3238, 7
        %v3240 = vsub.s32 %v3237, %v3239
        %v3241 = vrot.slane %v3179, %v3240
        %v3242 = vcombine.low %v3233, %v3241
        %v3243 = vcombine.high %v3233, %v3241
        %v3245 = vunpack.c.l.s4 1934713408
        %v3246 = vunpack.c.0.s8 %v3245
        %v3247 = vlaneseq
        %v3248 = vshrl.u32 %v3247, 7
        %v3249 = vsub.s32 %v3246, %v3248
        %v3250 = vrot.slane %v3242, %v3249
        %v3252 = vunpack.c.l.s4 1934713408
        %v3253 = vunpack.c.0.s8 %v3252
        %v3254 = vlaneseq
        %v3255 = vshrl.u32 %v3254, 7
        %v3256 = vsub.s32 %v3253, %v3255
        %v3257 = vrot.slane %v3243, %v3256
        %v3258 = vcombine.high %v3250, 0
        %v3259 = vcombine.high %v3257, 0
        %v3262 = vunpack.c.l.s4 1983009808
        %v3263 = vunpack.c.0.s8 %v3262
        %v3264 = vlaneseq
        %v3265 = vshrl.u32 %v3264, 7
        %v3266 = vsub.s32 %v3263, %v3265
        %v3267 = vrot.slane %v3182, %v3266
        %v3270 = vunpack.c.l.s4 1983009808
        %v3271 = vunpack.c.0.s8 %v3270
        %v3272 = vlaneseq
        %v3273 = vshrl.u32 %v3272, 7
        %v3274 = vsub.s32 %v3271, %v3273
        %v3275 = vrot.slane %v3188, %v3274
        %v3276 = vcombine.low %v3267, %v3275
        %v3277 = vcombine.high %v3267, %v3275
        %v3279 = vunpack.c.l.s4 1934713408
        %v3280 = vunpack.c.0.s8 %v3279
        %v3281 = vlaneseq
        %v3282 = vshrl.u32 %v3281, 7
        %v3283 = vsub.s32 %v3280, %v3282
        %v3284 = vrot.slane %v3276, %v3283
        %v3286 = vunpack.c.l.s4 1934713408
        %v3287 = vunpack.c.0.s8 %v3286
        %v3288 = vlaneseq
        %v3289 = vshrl.u32 %v3288, 7
        %v3290 = vsub.s32 %v3287, %v3289
        %v3291 = vrot.slane %v3277, %v3290
        %v3292 = vcombine.high %v3284, 0
        %v3293 = vcombine.high %v3291, 0
        %v3296 = vunpack.c.l.s4 1983009808
        %v3297 = vunpack.c.0.s8 %v3296
        %v3298 = vlaneseq
        %v3299 = vshrl.u32 %v3298, 7
        %v3300 = vsub.s32 %v3297, %v3299
        %v3301 = vrot.slane %v3185, %v3300
        %v3304 = vunpack.c.l.s4 1983009808
        %v3305 = vunpack.c.0.s8 %v3304
        %v3306 = vlaneseq
        %v3307 = vshrl.u32 %v3306, 7
        %v3308 = vsub.s32 %v3305, %v3307
        %v3309 = vrot.slane %v3191, %v3308
        %v3310 = vcombine.low %v3301, %v3309
        %v3311 = vcombine.high %v3301, %v3309
        %v3313 = vunpack.c.l.s4 1934713408
        %v3314 = vunpack.c.0.s8 %v3313
        %v3315 = vlaneseq
        %v3316 = vshrl.u32 %v3315, 7
        %v3317 = vsub.s32 %v3314, %v3316
        %v3318 = vrot.slane %v3310, %v3317
        %v3320 = vunpack.c.l.s4 1934713408
        %v3321 = vunpack.c.0.s8 %v3320
        %v3322 = vlaneseq
        %v3323 = vshrl.u32 %v3322, 7
        %v3324 = vsub.s32 %v3321, %v3323
        %v3325 = vrot.slane %v3311, %v3324
        %v3326 = vcombine.high %v3318, 0
        %v3327 = vcombine.high %v3325, 0
        %v3329 = vunpack.c.l.b16 %v3250
        %v3330 = vpack.c.b16 %v3329, %v3329
        %3331 = vrot.lane.b32.xlu0 %v3330, 16
        %v3332 = vpop.permute.xlu0 %3331
        %v3334 = vunpack.c.l.b16 %v3224
        %v3335 = vpack.c.b16 %v3334, %v3334
        %3336 = vrot.lane.b32.xlu0 %v3335, 32
        %v3337 = vpop.permute.xlu0 %3336
        %v3339 = vunpack.c.l.b16 %v3258
        %v3340 = vpack.c.b16 %v3339, %v3339
        %3341 = vrot.lane.b32.xlu0 %v3340, 48
        %v3342 = vpop.permute.xlu0 %3341
        %v3344 = vunpack.c.l.b16 %v3223
        %v3345 = vpack.c.b16 %v3344, %v3344
        %3346 = vrot.lane.b32.xlu0 %v3345, 64
        %v3347 = vpop.permute.xlu0 %3346
        %v3349 = vunpack.c.l.b16 %v3257
        %v3350 = vpack.c.b16 %v3349, %v3349
        %3351 = vrot.lane.b32.xlu0 %v3350, 80
        %v3352 = vpop.permute.xlu0 %3351
        %v3354 = vunpack.c.l.b16 %v3225
        %v3355 = vpack.c.b16 %v3354, %v3354
        %3356 = vrot.lane.b32.xlu0 %v3355, 96
        %v3357 = vpop.permute.xlu0 %3356
        %v3359 = vunpack.c.l.b16 %v3259
        %v3360 = vpack.c.b16 %v3359, %v3359
        %3361 = vrot.lane.b32.xlu0 %v3360, 112
        %v3362 = vpop.permute.xlu0 %3361
        %v3364 = vunpack.c.l.b16 %v3318
        %v3365 = vpack.c.b16 %v3364, %v3364
        %3366 = vrot.lane.b32.xlu0 %v3365, 16
        %v3367 = vpop.permute.xlu0 %3366
        %v3369 = vunpack.c.l.b16 %v3292
        %v3370 = vpack.c.b16 %v3369, %v3369
        %3371 = vrot.lane.b32.xlu0 %v3370, 32
        %v3372 = vpop.permute.xlu0 %3371
        %v3374 = vunpack.c.l.b16 %v3326
        %v3375 = vpack.c.b16 %v3374, %v3374
        %3376 = vrot.lane.b32.xlu0 %v3375, 48
        %v3377 = vpop.permute.xlu0 %3376
        %v3379 = vunpack.c.l.b16 %v3291
        %v3380 = vpack.c.b16 %v3379, %v3379
        %3381 = vrot.lane.b32.xlu0 %v3380, 64
        %v3382 = vpop.permute.xlu0 %3381
        %v3384 = vunpack.c.l.b16 %v3325
        %v3385 = vpack.c.b16 %v3384, %v3384
        %3386 = vrot.lane.b32.xlu0 %v3385, 80
        %v3387 = vpop.permute.xlu0 %3386
        %v3389 = vunpack.c.l.b16 %v3293
        %v3390 = vpack.c.b16 %v3389, %v3389
        %3391 = vrot.lane.b32.xlu0 %v3390, 96
        %v3392 = vpop.permute.xlu0 %3391
        %v3394 = vunpack.c.l.b16 %v3327
        %v3395 = vpack.c.b16 %v3394, %v3394
        %3396 = vrot.lane.b32.xlu0 %v3395, 112
        %v3397 = vpop.permute.xlu0 %3396
        %v3400 = vsel %vm641, %v3216, %v3332
        %v3402 = vsel %vm645, %v3400, %v3337
        %v3404 = vsel %vm648, %v3402, %v3342
        %v3406 = vsel %vm651, %v3404, %v3347
        %v3408 = vsel %vm654, %v3406, %v3352
        %v3410 = vsel %vm657, %v3408, %v3357
        %v3412 = vsel %vm660, %v3410, %v3362
        %v3415 = vsel %vm641, %v3284, %v3367
        %v3417 = vsel %vm645, %v3415, %v3372
        %v3419 = vsel %vm648, %v3417, %v3377
        %v3421 = vsel %vm651, %v3419, %v3382
        %v3423 = vsel %vm654, %v3421, %v3387
        %v3425 = vsel %vm657, %v3423, %v3392
        %v3427 = vsel %vm660, %v3425, %v3397
        %v3430 = vunpack.c.l.b16 %v3412
        %v3431 = vunpack.c.l.b16 %v3427
        %v3432 = vpack.c.b16 %v3431, %v3430
        %3434 = vst [vmem:[#allocation3 + $0x40] sm:$0x33] %v3432
        %v3435 = vld [vmem:[%s1] sm:$0xf]
        %v3436 = vld [vmem:[#allocation3] sm:$0xff]
        %v3437 = vld [vmem:[#allocation3 + $0x8] sm:$0xff]
        %v3438 = vld [vmem:[#allocation3 + $0x10] sm:$0xff]
        %v3439 = vld [vmem:[#allocation3 + $0x18] sm:$0xff]
        %v3440 = vld [vmem:[#allocation3 + $0x20] sm:$0xff]
        %v3441 = vld [vmem:[#allocation3 + $0x28] sm:$0xff]
        %v3442 = vld [vmem:[#allocation3 + $0x30] sm:$0xff]
        %v3443 = vld [vmem:[#allocation3 + $0x38] sm:$0xff]
        %v3444 = vld [vmem:[#allocation3 + $0x40] sm:$0xff]
        %v3445 = vld [vmem:[%s2] sm:$0xff]
        %3447 = vset.pattern.permute.xlu0 0
        %3448 = vperm.xlu0 %3447, %v3445
        %v3449 = vpop.permute.xlu0 %3448
        %v3460 = vunpack.c.l.b16 %v3436
        %v3461 = vunpack.c.h.b16 %v3436
        %v3462 = vunpack.c.l.b16 %v3437
        %v3463 = vunpack.c.h.b16 %v3437
        %v3464 = vunpack.c.l.b16 %v3438
        %v3465 = vunpack.c.h.b16 %v3438
        %v3466 = vunpack.c.l.b16 %v3439
        %v3467 = vunpack.c.h.b16 %v3439
        %v3468 = vunpack.c.l.b16 %v3440
        %v3469 = vunpack.c.h.b16 %v3440
        %v3470 = vunpack.c.l.b16 %v3441
        %v3471 = vunpack.c.h.b16 %v3441
        %v3472 = vunpack.c.l.b16 %v3442
        %v3473 = vunpack.c.h.b16 %v3442
        %v3474 = vunpack.c.l.b16 %v3443
        %v3475 = vunpack.c.h.b16 %v3443
        %v3476 = vunpack.c.l.b16 %v3444
        %v3477 = vunpack.c.h.b16 %v3444
        %v3478 = vpack.c.b16 %v3462, %v3460
        %v3479 = vpack.c.b16 %v3463, %v3461
        %v3480 = vpack.c.b16 %v3466, %v3464
        %v3481 = vpack.c.b16 %v3467, %v3465
        %v3482 = vpack.c.b16 %v3470, %v3468
        %v3483 = vpack.c.b16 %v3471, %v3469
        %v3484 = vpack.c.b16 %v3474, %v3472
        %v3485 = vpack.c.b16 %v3475, %v3473
        %v3486 = vpack.c.b16 %v3476, %v3476
        %v3487 = vpack.c.b16 %v3477, %v3477
        %vm3496 = vcmask 588800
        %v3498 = vsel %vm3496, %v3435, 0
        %vm3500 = vcmask 1043456
        %v3502 = vsel %vm3500, %v3486, 0
        %v3505 = vsel %vm3500, %v3487, 0
        %3507 = vmatprep.subr.bf16.mxu0 %v3479
        %3508 = vmatpush1.bf16.msra.mxu0 %v3478
        %3509 = vmatprep.subr.bf16.mxu0 %v3481
        %3510 = vmatpush1.bf16.msra.mxu0 %v3480
        %3511 = vmatprep.subr.bf16.mxu0 %v3483
        %3512 = vmatpush1.bf16.msra.mxu0 %v3482
        %3513 = vmatprep.subr.bf16.mxu0 %v3485
        %3514 = vmatpush1.bf16.msra.mxu0 %v3484
        %3515 = vmatprep.subr.bf16.mxu0 %v3505
        %3516 = vmatpush1.bf16.msra.mxu0 %v3502
        %3517 = vmatprep.subr.bf16.mxu0 0
        %3518 = vmatpush1.bf16.msra.mxu0 0
        %3519 = vmatprep.subr.bf16.mxu0 0
        %3520 = vmatpush1.bf16.msra.mxu0 0
        %3521 = vmatprep.subr.bf16.mxu0 0
        %3522 = vmatpush1.bf16.msra.mxu0 0
        %3523 = vmatprep.subr.bf16.mxu0 0
        %3524 = vmatpush1.bf16.msra.mxu0 0
        %3525 = vmatprep.subr.bf16.mxu0 0
        %3526 = vmatpush1.bf16.msra.mxu0 0
        %3527 = vmatprep.subr.bf16.mxu0 0
        %3528 = vmatpush1.bf16.msra.mxu0 0
        %3529 = vmatprep.subr.bf16.mxu0 0
        %3530 = vmatpush1.bf16.msra.mxu0 0
        %3531 = vmatprep.subr.bf16.mxu0 0
        %3532 = vmatpush1.bf16.msra.mxu0 0
        %3533 = vmatprep.subr.bf16.mxu0 0
        %3534 = vmatpush1.bf16.msra.mxu0 0
        %3535 = vmatprep.subr.bf16.mxu0 0
        %3536 = vmatpush1.bf16.msra.mxu0 0
        %3537 = vmatprep.subr.bf16.mxu0 0
        %3538 = vmatpush1.bf16.msra.mxu0 0
        %3539 = vmatprep.mubr.bf16.mxu0 0
        %3540 = vmatmul.mubr.bf16.gmra.mrb[0].mxu0 %v3498
        %v3541 = vpop.f32.mrb[0].mxu0
        %v3542 = vadd.f32 %v3449, %v3541
        %v3543 = vpop.f32.mrb[0].mxu0
        %v3544 = vadd.f32 %v3449, %v3543
        %v3545 = vpop.f32.mrb[0].mxu0
        %v3546 = vpop.f32.mrb[0].mxu0
        %3547 = vdwg.mxu0
        %v3548 = vmax.f32 %v3542, 0.0
        %v3549 = vmax.f32 %v3544, 0.0
        %3550 = vst [vmem:[%s188] sm:$0xff] %v3548
        %3551 = vst [vmem:[%s188 + $0x8] sm:$0xff] %v3549
        %s3552 = sand.u32 %s96, 1
        %s3553 = scalar_lea.sflag [#allocation6], %s3552
        %s3554 = sand.u32 %s96, 1
        %s3555 = smul.addr %s3554, 16
        %s3556 = scalar_lea.vmem [#allocation7], %s3555
        // Predicated region
        $region37: #{tpu_custom_call.1} parent=31 // pred_check
          %p3557 = pneg %p106
        $region38: #{tpu_custom_call.1} parent=31 // pred_check_branch
          %3559 = sbr.rel (%p3557) target = $region40
        $region39: #{tpu_custom_call.1} parent=31 // pred_region
          %s3561 = ssub.s32 256, 256
          %3562 = vsyncadd %s3553, %s3561
          %s3563 = smul.addr %s20, 2
          %s3564 = smul.addr %s3563, 128
          %s3565 = scalar_lea.hbm %s3, %s3564
          %s3567 = sshll.u32 %s3556, 4
          %s3568 = int_to_ptr.vmem [resolvable:$true] %s3567
          %3570 = dma.vmem_to_hbm [thread:$0]  %s3568, 256, %s3565, %s3553
        $region40: #{tpu_custom_call.1} parent=31 // pred_fallthru
          _
      $region32: #{tpu_custom_call.1} parent=5 // pred_fallthru
        _
      %p3571 = scmp.le.s32.totalorder 2, %s15
      // Predicated region
      $region41: #{tpu_custom_call.1} parent=5 // pred_check
        %p3572 = pneg %p3571
      $region42: #{tpu_custom_call.1} parent=5 // pred_check_branch
        %3574 = sbr.rel (%p3572) target = $region44
      $region43: #{tpu_custom_call.1} parent=5 // pred_region
        %s3575 = ssub.s32 %s15, 2
        // Predicated region
        $region45: #{tpu_custom_call.1} parent=43 // pred_check
          %p3576 = pneg %p112
        $region46: #{tpu_custom_call.1} parent=43 // pred_check_branch
          %3578 = sbr.rel (%p3576) target = $region48
        $region47: #{tpu_custom_call.1} parent=43 // pred_region
          %s3579 = sand.u32 %s97, 1
          %s3580 = scalar_lea.sflag [#allocation6], %s3579
          %s3581 = sand.u32 %s97, 1
          %s3582 = smul.addr %s3581, 16
          %s3583 = scalar_lea.vmem [#allocation7], %s3582
          %3584 = dma.done %s3580, 256
        $region48: #{tpu_custom_call.1} parent=43 // pred_fallthru
          _
      $region44: #{tpu_custom_call.1} parent=5 // pred_fallthru
        _
    $region6: #{tpu_custom_call.1} parent=1 // loop_footer
      %s19 = sadd.s32 1, %s15
    $region7: #{tpu_custom_call.1} parent=1 // loop_footer_branch
      %14 = sbr.rel target = $region3
    $region8: #{tpu_custom_call.1} parent=1 // loop_exit
      _
    %3585 = vsyncpa [#allocation5], 1
    %s3586 = scalar_lea.sflag [#allocation5], 1
    %3587 = vsyncpa %s3586, 1
    %3588 = vsyncpa [#allocation6], 1
    %s3589 = scalar_lea.sflag [#allocation6], 1
    %3590 = vsyncpa %s3589, 1

</llo_original>
